<compile_context>
chip_gen: v7x
topology: tpu7x:2x2x1
jax: 0.10.0
libtpu: 0.0.40
codegen_flags: <defaults>
</compile_context>

<pallas_src>
import math
import functools

import jax
import jax.numpy as jnp
from jax.experimental import pallas as pl
from jax.experimental.pallas import tpu as pltpu


# ----------------------------------------------------------------------------
# Fused projection + flash attention kernel.
# grid = (B, num_q_tiles, num_kv_tiles); kv axis is the (arbitrary) reduction.
# ----------------------------------------------------------------------------
def _attn_kernel(qin_ref, kin_ref, vin_ref,
                 wq_ref, bq_ref, wk_ref, bk_ref, wv_ref, bv_ref,
                 o_ref,
                 q_sc, m_sc, l_sc, acc_sc,
                 *, scale):
    kv = pl.program_id(2)

    @pl.when(kv == 0)
    def _init():
        # Project the Q tile once per (batch, q-tile) and fold the 1/sqrt(dk)
        # scale into Q (cheaper than scaling the (tq, tk) scores every step).
        q = jnp.dot(qin_ref[0], wq_ref[...],
                    preferred_element_type=jnp.float32) + bq_ref[...]
        q_sc[...] = (q * scale).astype(q_sc.dtype)
        m_sc[...] = jnp.full_like(m_sc, -jnp.inf)
        l_sc[...] = jnp.zeros_like(l_sc)
        acc_sc[...] = jnp.zeros_like(acc_sc)

    # Project the current K / V tiles (bf16 MXU inputs, f32 accumulation).
    k = (jnp.dot(kin_ref[0], wk_ref[...],
                 preferred_element_type=jnp.float32)
         + bk_ref[...]).astype(jnp.bfloat16)
    v = (jnp.dot(vin_ref[0], wv_ref[...],
                 preferred_element_type=jnp.float32)
         + bv_ref[...]).astype(jnp.bfloat16)

    # Online-softmax flash step (all softmax math in f32).
    s = jnp.dot(q_sc[...], k.T, preferred_element_type=jnp.float32)    # (tq, tk)
    m_new = jnp.maximum(m_sc[...], s.max(axis=-1, keepdims=True))
    alpha = jnp.exp(m_sc[...] - m_new)
    p = jnp.exp(s - m_new)
    l_sc[...] = alpha * l_sc[...] + p.sum(axis=-1, keepdims=True)
    acc_sc[...] = alpha * acc_sc[...] + jnp.dot(
        p.astype(jnp.bfloat16), v, preferred_element_type=jnp.float32)
    m_sc[...] = m_new

    @pl.when(kv == pl.num_programs(2) - 1)
    def _finalize():
        inv_l = pl.reciprocal(l_sc[...], approx=True)   # EUP slot, ~free
        o_ref[0] = (acc_sc[...] * inv_l).astype(o_ref.dtype)


def dot_product_attention(q_in, k_in, v_in, params, *, tq=128, tk=128):
    wq, bq = params["wq"], params["bq"]
    wk, bk = params["wk"], params["bk"]
    wv, bv = params["wv"], params["bv"]

    B, Sq, dm = q_in.shape
    _, Sk, _ = k_in.shape
    dq, dk, dv = wq.shape[1], wk.shape[1], wv.shape[1]
    assert dq == dk, "q @ k^T requires dim_q == dim_k"

    tq = min(tq, Sq)
    tk = min(tk, Sk)
    assert Sq % tq == 0 and Sk % tk == 0, "sequence lengths must divide the tiles"

    scale = 1.0 / math.sqrt(dk)

    # bf16 MXU inputs (halves HBM/VMEM traffic); accumulation stays f32.
    qb = q_in.astype(jnp.bfloat16)
    kb = k_in.astype(jnp.bfloat16)
    vb = v_in.astype(jnp.bfloat16)
    wq_b = wq.astype(jnp.bfloat16)
    wk_b = wk.astype(jnp.bfloat16)
    wv_b = wv.astype(jnp.bfloat16)

    grid = (B, Sq // tq, Sk // tk)
    kernel = functools.partial(_attn_kernel, scale=scale)

    return pl.pallas_call(
        kernel,
        out_shape=jax.ShapeDtypeStruct((B, Sq, dv), jnp.float32),
        grid_spec=pltpu.PrefetchScalarGridSpec(
            num_scalar_prefetch=0,
            grid=grid,
            in_specs=[
                # activations
                pl.BlockSpec((1, tq, dm), lambda b, qi, ki: (b, qi, 0)),
                pl.BlockSpec((1, tk, dm), lambda b, qi, ki: (b, ki, 0)),
                pl.BlockSpec((1, tk, dm), lambda b, qi, ki: (b, ki, 0)),
                # weights / biases (constant block index -> stay resident)
                pl.BlockSpec((dm, dq), lambda b, qi, ki: (0, 0)),
                pl.BlockSpec((1, dq), lambda b, qi, ki: (0, 0)),
                pl.BlockSpec((dm, dk), lambda b, qi, ki: (0, 0)),
                pl.BlockSpec((1, dk), lambda b, qi, ki: (0, 0)),
                pl.BlockSpec((dm, dv), lambda b, qi, ki: (0, 0)),
                pl.BlockSpec((1, dv), lambda b, qi, ki: (0, 0)),
            ],
            out_specs=pl.BlockSpec((1, tq, dv), lambda b, qi, ki: (b, qi, 0)),
            scratch_shapes=[
                pltpu.VMEM((tq, dq), jnp.bfloat16),   # scaled Q tile
                pltpu.VMEM((tq, 1), jnp.float32),     # running max m
                pltpu.VMEM((tq, 1), jnp.float32),     # running sum l
                pltpu.VMEM((tq, dv), jnp.float32),    # output accumulator
            ]),
        compiler_params=pltpu.CompilerParams(
            dimension_semantics=("parallel", "parallel", "arbitrary")),
    )(qb, kb, vb, wq_b, bq, wk_b, bk, wv_b, bv)


# ----------------------------------------------------------------------------
# Parameter init (PyTorch nn.Linear style) and pure-JAX reference.
# ----------------------------------------------------------------------------
def init_attention_params(key, dim_m, dim_q, dim_k, dim_v):
    def linear(k, fan_in, fan_out):
        kw, kb = jax.random.split(k)
        bound = 1.0 / math.sqrt(fan_in)
        w = jax.random.uniform(kw, (fan_in, fan_out), jnp.float32, -bound, bound)
        b = jax.random.uniform(kb, (1, fan_out), jnp.float32, -bound, bound)
        return w, b

    kq, kk, kv = jax.random.split(key, 3)
    wq, bq = linear(kq, dim_m, dim_q)
    wk, bk = linear(kk, dim_m, dim_k)
    wv, bv = linear(kv, dim_m, dim_v)
    return dict(wq=wq, bq=bq, wk=wk, bk=bk, wv=wv, bv=bv)


def dot_product_attention_ref(q_in, k_in, v_in, params):
    """Pure-JAX reference mirroring the kernel's bf16 matmul inputs."""
    bf = lambda x: x.astype(jnp.bfloat16).astype(jnp.float32)
    q = bf(q_in) @ bf(params["wq"]) + params["bq"]
    k = bf(k_in) @ bf(params["wk"]) + params["bk"]
    v = bf(v_in) @ bf(params["wv"]) + params["bv"]
    scale = 1.0 / math.sqrt(params["wk"].shape[1])
    s = jnp.einsum("bqd,bkd->bqk", bf(q * scale), bf(k))
    a = jax.nn.softmax(s, axis=-1)
    return jnp.einsum("bqk,bkd->bqd", bf(a), bf(v))


if __name__ == "__main__":
    B, S = 2, 256
    dim_m = dim_q = dim_k = dim_v = 128   # lane-dense (multiples of 128)

    key = jax.random.PRNGKey(0)
    kq, kk, kv, kp = jax.random.split(key, 4)
    q_in = jax.random.normal(kq, (B, S, dim_m), jnp.float32)
    k_in = jax.random.normal(kk, (B, S, dim_m), jnp.float32)
    v_in = jax.random.normal(kv, (B, S, dim_m), jnp.float32)
    params = init_attention_params(kp, dim_m, dim_q, dim_k, dim_v)

    out = dot_product_attention(q_in, k_in, v_in, params)
    out = jax.block_until_ready(out)

    ref = dot_product_attention_ref(q_in, k_in, v_in, params)
    assert out.shape == (B, S, dim_v)
    max_err = float(jnp.max(jnp.abs(out - ref)))
    assert jnp.allclose(out, ref, atol=1e-2, rtol=1e-2), \
        f"mismatch vs pure-JAX reference (max abs err = {max_err})"

    print("KERNEL_OK")
</pallas_src>

<mosaic_0001>
module attributes {stable_mosaic.version = 11 : i64} {
  func.func @_attn_kernel(%arg0: i32, %arg1: i32, %arg2: i32, %arg3: memref<1x128x128xbf16, #tpu.memory_space<vmem>>, %arg4: memref<1x128x128xbf16, #tpu.memory_space<vmem>>, %arg5: memref<1x128x128xbf16, #tpu.memory_space<vmem>>, %arg6: memref<128x128xbf16, #tpu.memory_space<vmem>>, %arg7: memref<1x128xf32, #tpu.memory_space<vmem>>, %arg8: memref<128x128xbf16, #tpu.memory_space<vmem>>, %arg9: memref<1x128xf32, #tpu.memory_space<vmem>>, %arg10: memref<128x128xbf16, #tpu.memory_space<vmem>>, %arg11: memref<1x128xf32, #tpu.memory_space<vmem>>, %arg12: memref<1x128x128xf32, #tpu.memory_space<vmem>>, %arg13: memref<128x128xbf16, #tpu.memory_space<vmem>>, %arg14: memref<128x1xf32, #tpu.memory_space<vmem>>, %arg15: memref<128x1xf32, #tpu.memory_space<vmem>>, %arg16: memref<128x128xf32, #tpu.memory_space<vmem>>) attributes {dimension_semantics = [#tpu.dimension_semantics<parallel>, #tpu.dimension_semantics<parallel>, #tpu.dimension_semantics<arbitrary>], iteration_bounds = array<i64: 2, 2, 2>, scalar_prefetch = 0 : i64, scratch_operands = 4 : i64, tpu.core_type = #tpu.core_type<tc>, window_params = [{transform_indices = @transform_0, window_bounds = array<i64: 1, 128, 128>}, {transform_indices = @transform_1, window_bounds = array<i64: 1, 128, 128>}, {transform_indices = @transform_2, window_bounds = array<i64: 1, 128, 128>}, {pipeline_mode = #tpu.pipeline_mode<synchronous>, transform_indices = @transform_3, window_bounds = array<i64: 128, 128>}, {pipeline_mode = #tpu.pipeline_mode<synchronous>, transform_indices = @transform_4, window_bounds = array<i64: 1, 128>}, {pipeline_mode = #tpu.pipeline_mode<synchronous>, transform_indices = @transform_5, window_bounds = array<i64: 128, 128>}, {pipeline_mode = #tpu.pipeline_mode<synchronous>, transform_indices = @transform_6, window_bounds = array<i64: 1, 128>}, {pipeline_mode = #tpu.pipeline_mode<synchronous>, transform_indices = @transform_7, window_bounds = array<i64: 128, 128>}, {pipeline_mode = #tpu.pipeline_mode<synchronous>, transform_indices = @transform_8, window_bounds = array<i64: 1, 128>}, {transform_indices = @transform_9, window_bounds = array<i64: 1, 128, 128>}]} {
    %c0_i32 = arith.constant 0 : i32
    %0 = arith.cmpi eq, %arg2, %c0_i32 : i32
    %1 = arith.extui %0 : i1 to i32
    %c0_i32_0 = arith.constant 0 : i32
    %2 = arith.cmpi ne, %1, %c0_i32_0 : i32
    scf.if %2 {
      %c0_36 = arith.constant 0 : index
      %c0_37 = arith.constant 0 : index
      %c0_38 = arith.constant 0 : index
      %49 = vector.load %arg3[%c0_36, %c0_37, %c0_38] : memref<1x128x128xbf16, #tpu.memory_space<vmem>>, vector<1x128x128xbf16>
      %50 = vector.shape_cast %49 : vector<1x128x128xbf16> to vector<128x128xbf16>
      %c0_39 = arith.constant 0 : index
      %c0_40 = arith.constant 0 : index
      %51 = vector.load %arg6[%c0_39, %c0_40] : memref<128x128xbf16, #tpu.memory_space<vmem>>, vector<128x128xbf16>
      %cst_41 = arith.constant dense<0.000000e+00> : vector<128x128xf32>
      %52 = tpu.matmul %50, %51, %cst_41 {dimension_numbers = #tpu.dot_dimension_numbers<[1], [0], [0], [1], [0, 0, 1, 1], [], []>} : vector<128x128xbf16>, vector<128x128xbf16>, vector<128x128xf32> -> vector<128x128xf32>
      %c0_42 = arith.constant 0 : index
      %c0_43 = arith.constant 0 : index
      %53 = vector.load %arg7[%c0_42, %c0_43] : memref<1x128xf32, #tpu.memory_space<vmem>>, vector<1x128xf32>
      %54 = vector.broadcast %53 : vector<1x128xf32> to vector<128x128xf32>
      %55 = arith.addf %52, %54 : vector<128x128xf32>
      %cst_44 = arith.constant 0.0883883461 : f32
      %56 = vector.broadcast %cst_44 : f32 to vector<128x128xf32>
      %57 = arith.mulf %55, %56 : vector<128x128xf32>
      %58 = arith.truncf %57 : vector<128x128xf32> to vector<128x128xbf16>
      %c0_45 = arith.constant 0 : index
      %c0_46 = arith.constant 0 : index
      %59 = vector.load %arg13[%c0_45, %c0_46] : memref<128x128xbf16, #tpu.memory_space<vmem>>, vector<128x128xbf16>
      tpu.vector_store %arg13[%c0_45, %c0_46], %58 {strides = array<i32>} : memref<128x128xbf16, #tpu.memory_space<vmem>>, vector<128x128xbf16>,
      %cst_47 = arith.constant 0xFF800000 : f32
      %60 = vector.broadcast %cst_47 : f32 to vector<128x1xf32>
      %c0_48 = arith.constant 0 : index
      %c0_49 = arith.constant 0 : index
      %61 = vector.load %arg14[%c0_48, %c0_49] : memref<128x1xf32, #tpu.memory_space<vmem>>, vector<128x1xf32>
      tpu.vector_store %arg14[%c0_48, %c0_49], %60 {strides = array<i32>} : memref<128x1xf32, #tpu.memory_space<vmem>>, vector<128x1xf32>,
      %cst_50 = arith.constant 0.000000e+00 : f32
      %62 = vector.broadcast %cst_50 : f32 to vector<128x1xf32>
      %c0_51 = arith.constant 0 : index
      %c0_52 = arith.constant 0 : index
      %63 = vector.load %arg15[%c0_51, %c0_52] : memref<128x1xf32, #tpu.memory_space<vmem>>, vector<128x1xf32>
      tpu.vector_store %arg15[%c0_51, %c0_52], %62 {strides = array<i32>} : memref<128x1xf32, #tpu.memory_space<vmem>>, vector<128x1xf32>,
      %cst_53 = arith.constant 0.000000e+00 : f32
      %64 = vector.broadcast %cst_53 : f32 to vector<128x128xf32>
      %c0_54 = arith.constant 0 : index
      %c0_55 = arith.constant 0 : index
      %65 = vector.load %arg16[%c0_54, %c0_55] : memref<128x128xf32, #tpu.memory_space<vmem>>, vector<128x128xf32>
      tpu.vector_store %arg16[%c0_54, %c0_55], %64 {strides = array<i32>} : memref<128x128xf32, #tpu.memory_space<vmem>>, vector<128x128xf32>,
    } else {
    }
    %c0 = arith.constant 0 : index
    %c0_1 = arith.constant 0 : index
    %c0_2 = arith.constant 0 : index
    %3 = vector.load %arg4[%c0, %c0_1, %c0_2] : memref<1x128x128xbf16, #tpu.memory_space<vmem>>, vector<1x128x128xbf16>
    %4 = vector.shape_cast %3 : vector<1x128x128xbf16> to vector<128x128xbf16>
    %c0_3 = arith.constant 0 : index
    %c0_4 = arith.constant 0 : index
    %5 = vector.load %arg8[%c0_3, %c0_4] : memref<128x128xbf16, #tpu.memory_space<vmem>>, vector<128x128xbf16>
    %cst = arith.constant dense<0.000000e+00> : vector<128x128xf32>
    %6 = tpu.matmul %4, %5, %cst {dimension_numbers = #tpu.dot_dimension_numbers<[1], [0], [0], [1], [0, 0, 1, 1], [], []>} : vector<128x128xbf16>, vector<128x128xbf16>, vector<128x128xf32> -> vector<128x128xf32>
    %c0_5 = arith.constant 0 : index
    %c0_6 = arith.constant 0 : index
    %7 = vector.load %arg9[%c0_5, %c0_6] : memref<1x128xf32, #tpu.memory_space<vmem>>, vector<1x128xf32>
    %8 = vector.broadcast %7 : vector<1x128xf32> to vector<128x128xf32>
    %9 = arith.addf %6, %8 : vector<128x128xf32>
    %10 = arith.truncf %9 : vector<128x128xf32> to vector<128x128xbf16>
    %c0_7 = arith.constant 0 : index
    %c0_8 = arith.constant 0 : index
    %c0_9 = arith.constant 0 : index
    %11 = vector.load %arg5[%c0_7, %c0_8, %c0_9] : memref<1x128x128xbf16, #tpu.memory_space<vmem>>, vector<1x128x128xbf16>
    %12 = vector.shape_cast %11 : vector<1x128x128xbf16> to vector<128x128xbf16>
    %c0_10 = arith.constant 0 : index
    %c0_11 = arith.constant 0 : index
    %13 = vector.load %arg10[%c0_10, %c0_11] : memref<128x128xbf16, #tpu.memory_space<vmem>>, vector<128x128xbf16>
    %cst_12 = arith.constant dense<0.000000e+00> : vector<128x128xf32>
    %14 = tpu.matmul %12, %13, %cst_12 {dimension_numbers = #tpu.dot_dimension_numbers<[1], [0], [0], [1], [0, 0, 1, 1], [], []>} : vector<128x128xbf16>, vector<128x128xbf16>, vector<128x128xf32> -> vector<128x128xf32>
    %c0_13 = arith.constant 0 : index
    %c0_14 = arith.constant 0 : index
    %15 = vector.load %arg11[%c0_13, %c0_14] : memref<1x128xf32, #tpu.memory_space<vmem>>, vector<1x128xf32>
    %16 = vector.broadcast %15 : vector<1x128xf32> to vector<128x128xf32>
    %17 = arith.addf %14, %16 : vector<128x128xf32>
    %18 = arith.truncf %17 : vector<128x128xf32> to vector<128x128xbf16>
    %c0_15 = arith.constant 0 : index
    %c0_16 = arith.constant 0 : index
    %19 = vector.load %arg13[%c0_15, %c0_16] : memref<128x128xbf16, #tpu.memory_space<vmem>>, vector<128x128xbf16>
    %20 = tpu.transpose %10, [1, 0] : vector<128x128xbf16> -> vector<128x128xbf16>
    %cst_17 = arith.constant dense<0.000000e+00> : vector<128x128xf32>
    %21 = tpu.matmul %19, %20, %cst_17 {dimension_numbers = #tpu.dot_dimension_numbers<[1], [0], [0], [1], [0, 0, 1, 1], [], []>} : vector<128x128xbf16>, vector<128x128xbf16>, vector<128x128xf32> -> vector<128x128xf32>
    %c0_18 = arith.constant 0 : index
    %c0_19 = arith.constant 0 : index
    %22 = vector.load %arg14[%c0_18, %c0_19] : memref<128x1xf32, #tpu.memory_space<vmem>>, vector<128x1xf32>
    %cst_20 = arith.constant dense<0xFF800000> : vector<128xf32>
    %23 = vector.multi_reduction <maximumf>, %21, %cst_20 [1] : vector<128x128xf32> to vector<128xf32>
    %24 = vector.shape_cast %23 : vector<128xf32> to vector<128x1xf32>
    %25 = arith.maximumf %22, %24 : vector<128x1xf32>
    %c0_21 = arith.constant 0 : index
    %c0_22 = arith.constant 0 : index
    %26 = vector.load %arg14[%c0_21, %c0_22] : memref<128x1xf32, #tpu.memory_space<vmem>>, vector<128x1xf32>
    %27 = arith.subf %26, %25 : vector<128x1xf32>
    %28 = math.exp %27 : vector<128x1xf32>
    %29 = vector.broadcast %25 : vector<128x1xf32> to vector<128x128xf32>
    %30 = arith.subf %21, %29 : vector<128x128xf32>
    %31 = math.exp %30 : vector<128x128xf32>
    %c0_23 = arith.constant 0 : index
    %c0_24 = arith.constant 0 : index
    %32 = vector.load %arg15[%c0_23, %c0_24] : memref<128x1xf32, #tpu.memory_space<vmem>>, vector<128x1xf32>
    %33 = arith.mulf %28, %32 : vector<128x1xf32>
    %cst_25 = arith.constant dense<0.000000e+00> : vector<128xf32>
    %34 = vector.multi_reduction <add>, %31, %cst_25 [1] : vector<128x128xf32> to vector<128xf32>
    %35 = vector.shape_cast %34 : vector<128xf32> to vector<128x1xf32>
    %36 = arith.addf %33, %35 : vector<128x1xf32>
    %c0_26 = arith.constant 0 : index
    %c0_27 = arith.constant 0 : index
    %37 = vector.load %arg15[%c0_26, %c0_27] : memref<128x1xf32, #tpu.memory_space<vmem>>, vector<128x1xf32>
    tpu.vector_store %arg15[%c0_26, %c0_27], %36 {strides = array<i32>} : memref<128x1xf32, #tpu.memory_space<vmem>>, vector<128x1xf32>,
    %c0_28 = arith.constant 0 : index
    %c0_29 = arith.constant 0 : index
    %38 = vector.load %arg16[%c0_28, %c0_29] : memref<128x128xf32, #tpu.memory_space<vmem>>, vector<128x128xf32>
    %39 = vector.broadcast %28 : vector<128x1xf32> to vector<128x128xf32>
    %40 = arith.mulf %39, %38 : vector<128x128xf32>
    %41 = arith.truncf %31 : vector<128x128xf32> to vector<128x128xbf16>
    %cst_30 = arith.constant dense<0.000000e+00> : vector<128x128xf32>
    %42 = tpu.matmul %41, %18, %cst_30 {dimension_numbers = #tpu.dot_dimension_numbers<[1], [0], [0], [1], [0, 0, 1, 1], [], []>} : vector<128x128xbf16>, vector<128x128xbf16>, vector<128x128xf32> -> vector<128x128xf32>
    %43 = arith.addf %40, %42 : vector<128x128xf32>
    %c0_31 = arith.constant 0 : index
    %c0_32 = arith.constant 0 : index
    %44 = vector.load %arg16[%c0_31, %c0_32] : memref<128x128xf32, #tpu.memory_space<vmem>>, vector<128x128xf32>
    tpu.vector_store %arg16[%c0_31, %c0_32], %43 {strides = array<i32>} : memref<128x128xf32, #tpu.memory_space<vmem>>, vector<128x128xf32>,
    %c0_33 = arith.constant 0 : index
    %c0_34 = arith.constant 0 : index
    %45 = vector.load %arg14[%c0_33, %c0_34] : memref<128x1xf32, #tpu.memory_space<vmem>>, vector<128x1xf32>
    tpu.vector_store %arg14[%c0_33, %c0_34], %25 {strides = array<i32>} : memref<128x1xf32, #tpu.memory_space<vmem>>, vector<128x1xf32>,
    %c1_i32 = arith.constant 1 : i32
    %46 = arith.cmpi eq, %arg2, %c1_i32 : i32
    %47 = arith.extui %46 : i1 to i32
    %c0_i32_35 = arith.constant 0 : i32
    %48 = arith.cmpi ne, %47, %c0_i32_35 : i32
    scf.if %48 {
      %c0_36 = arith.constant 0 : index
      %c0_37 = arith.constant 0 : index
      %49 = vector.load %arg15[%c0_36, %c0_37] : memref<128x1xf32, #tpu.memory_space<vmem>>, vector<128x1xf32>
      %50 = tpu.reciprocal %49 {approx = true} : vector<128x1xf32> -> vector<128x1xf32>
      %c0_38 = arith.constant 0 : index
      %c0_39 = arith.constant 0 : index
      %51 = vector.load %arg16[%c0_38, %c0_39] : memref<128x128xf32, #tpu.memory_space<vmem>>, vector<128x128xf32>
      %52 = vector.broadcast %50 : vector<128x1xf32> to vector<128x128xf32>
      %53 = arith.mulf %51, %52 : vector<128x128xf32>
      %c0_40 = arith.constant 0 : index
      %c0_41 = arith.constant 0 : index
      %c0_42 = arith.constant 0 : index
      %54 = vector.load %arg12[%c0_40, %c0_41, %c0_42] : memref<1x128x128xf32, #tpu.memory_space<vmem>>, vector<1x128x128xf32>
      %55 = vector.shape_cast %54 : vector<1x128x128xf32> to vector<128x128xf32>
      %56 = vector.shape_cast %53 : vector<128x128xf32> to vector<1x128x128xf32>
      tpu.vector_store %arg12[%c0_40, %c0_41, %c0_42], %56 {strides = array<i32>} : memref<1x128x128xf32, #tpu.memory_space<vmem>>, vector<1x128x128xf32>,
    } else {
    }
    return
  }
  func.func @transform_0(%arg0: i32, %arg1: i32, %arg2: i32) -> (i32, i32, i32) {
    %c0_i32 = arith.constant 0 : i32
    %c0_i32_0 = arith.constant 0 : i32
    return %arg0, %arg1, %c0_i32 : i32, i32, i32
  }
  func.func @transform_1(%arg0: i32, %arg1: i32, %arg2: i32) -> (i32, i32, i32) {
    %c0_i32 = arith.constant 0 : i32
    %c0_i32_0 = arith.constant 0 : i32
    return %arg0, %arg2, %c0_i32 : i32, i32, i32
  }
  func.func @transform_2(%arg0: i32, %arg1: i32, %arg2: i32) -> (i32, i32, i32) {
    %c0_i32 = arith.constant 0 : i32
    %c0_i32_0 = arith.constant 0 : i32
    return %arg0, %arg2, %c0_i32 : i32, i32, i32
  }
  func.func @transform_3(%arg0: i32, %arg1: i32, %arg2: i32) -> (i32, i32) {
    %c0_i32 = arith.constant 0 : i32
    %c0_i32_0 = arith.constant 0 : i32
    %c0_i32_1 = arith.constant 0 : i32
    return %c0_i32, %c0_i32_0 : i32, i32
  }
  func.func @transform_4(%arg0: i32, %arg1: i32, %arg2: i32) -> (i32, i32) {
    %c0_i32 = arith.constant 0 : i32
    %c0_i32_0 = arith.constant 0 : i32
    %c0_i32_1 = arith.constant 0 : i32
    return %c0_i32, %c0_i32_0 : i32, i32
  }
  func.func @transform_5(%arg0: i32, %arg1: i32, %arg2: i32) -> (i32, i32) {
    %c0_i32 = arith.constant 0 : i32
    %c0_i32_0 = arith.constant 0 : i32
    %c0_i32_1 = arith.constant 0 : i32
    return %c0_i32, %c0_i32_0 : i32, i32
  }
  func.func @transform_6(%arg0: i32, %arg1: i32, %arg2: i32) -> (i32, i32) {
    %c0_i32 = arith.constant 0 : i32
    %c0_i32_0 = arith.constant 0 : i32
    %c0_i32_1 = arith.constant 0 : i32
    return %c0_i32, %c0_i32_0 : i32, i32
  }
  func.func @transform_7(%arg0: i32, %arg1: i32, %arg2: i32) -> (i32, i32) {
    %c0_i32 = arith.constant 0 : i32
    %c0_i32_0 = arith.constant 0 : i32
    %c0_i32_1 = arith.constant 0 : i32
    return %c0_i32, %c0_i32_0 : i32, i32
  }
  func.func @transform_8(%arg0: i32, %arg1: i32, %arg2: i32) -> (i32, i32) {
    %c0_i32 = arith.constant 0 : i32
    %c0_i32_0 = arith.constant 0 : i32
    %c0_i32_1 = arith.constant 0 : i32
    return %c0_i32, %c0_i32_0 : i32, i32
  }
  func.func @transform_9(%arg0: i32, %arg1: i32, %arg2: i32) -> (i32, i32, i32) {
    %c0_i32 = arith.constant 0 : i32
    %c0_i32_0 = arith.constant 0 : i32
    return %arg0, %arg1, %c0_i32 : i32, i32, i32
  }
}

</mosaic_0001>

<llo_original>
// kernel: tpu_custom_call.1
$region0: #{tpu_custom_call.1}
  #allocation0 [shape = 'u32[]', space=smem, size = 0x4, offset = 0x4, fixed_abs, tag = 'smem constant byte address 0x4 - core index']
  #allocation1 [shape = 'u32[144,128]{1,0:T(1,128)}', space=vmem, size = 0x12000, scoped, tag = 'internal scratch']
  #allocation2 [shape = 'bf16[128,128]{1,0:T(16,128)(2,1)}', space=vmem, size = 0x8000, scoped, tag = 'scratch operand']
  #allocation3 [shape = 'f32[128,1]{1,0:T(8,128)}', space=vmem, size = 0x10000, scoped, tag = 'scratch operand']
  #allocation4 [shape = 'f32[128,1]{1,0:T(8,128)}', space=vmem, size = 0x10000, scoped, tag = 'scratch operand']
  #allocation5 [shape = 'f32[128,128]{1,0:T(8,128)}', space=vmem, size = 0x10000, scoped, tag = 'scratch operand']
  %s0 = inlined_call_operand.hbm [shape: bf16[2,256,128], index: 0, kind: input, shape index: {}]
  %s1 = inlined_call_operand.hbm [shape: bf16[2,256,128], index: 1, kind: input, shape index: {}]
  %s2 = inlined_call_operand.hbm [shape: bf16[2,256,128], index: 2, kind: input, shape index: {}]
  %s3 = inlined_call_operand.hbm [shape: bf16[128,128], index: 3, kind: input, shape index: {}]
  %s4 = inlined_call_operand.vmem [shape: f32[1,128], index: 4, kind: input, shape index: {}]
  %s5 = inlined_call_operand.hbm [shape: bf16[128,128], index: 5, kind: input, shape index: {}]
  %s6 = inlined_call_operand.vmem [shape: f32[1,128], index: 6, kind: input, shape index: {}]
  %s7 = inlined_call_operand.hbm [shape: bf16[128,128], index: 7, kind: input, shape index: {}]
  %s8 = inlined_call_operand.vmem [shape: f32[1,128], index: 8, kind: input, shape index: {}]
  %s9 = inlined_call_operand.hbm [shape: f32[2,256,128], index: 9, kind: output, shape index: {}]
  %s10 = sld [smem:[#allocation0]]
  $region101: #{tpu_custom_call.1} parent=0
    _
  %s12 = ssub.s32 1, %s10
  %s13 = scalar_select 0, %s12, %s10
  $region1: #{tpu_custom_call.1} parent=0
    #allocation6 [shape = 'u8[65536]{0}', space=vmem, size = 0x10000, scoped, tag = 'input window, operand 0']
    #allocation7 [shape = 's32[2]{0}', space=sflag, size = 0x8, scoped, tag = 'scoped memory for tpu_custom_call.1']
    #allocation8 [shape = 's32[2]{0}', space=sflag, size = 0x8, scoped, tag = 'scoped memory for tpu_custom_call.1']
    #allocation9 [shape = 'u8[65536]{0}', space=vmem, size = 0x10000, scoped, tag = 'input window, operand 1']
    #allocation10 [shape = 's32[2]{0}', space=sflag, size = 0x8, scoped, tag = 'scoped memory for tpu_custom_call.1']
    #allocation11 [shape = 'u8[65536]{0}', space=vmem, size = 0x10000, scoped, tag = 'input window, operand 2']
    #allocation12 [shape = 'u8[32768]{0}', space=vmem, size = 0x8000, scoped, tag = 'input window, operand 3, single buffered']
    #allocation13 [shape = 's32[1]{0}', space=sflag, size = 0x4, scoped, tag = 'scoped memory for tpu_custom_call.1']
    #allocation14 [shape = 'u8[32768]{0}', space=vmem, size = 0x8000, scoped, tag = 'input window, operand 5, single buffered']
    #allocation15 [shape = 'u8[32768]{0}', space=vmem, size = 0x8000, scoped, tag = 'input window, operand 7, single buffered']
    #allocation16 [shape = 's32[1]{0}', space=sflag, size = 0x4, scoped, tag = 'scoped memory for tpu_custom_call.1']
    #allocation17 [shape = 'u8[131072]{0}', space=vmem, size = 0x20000, scoped, tag = 'output window, operand 0']
    %14 = vsyncpa [#allocation7], 0
    %s15 = scalar_lea.sflag [#allocation7], 1
    %16 = vsyncpa %s15, 0
    %17 = vsyncpa [#allocation10], 0
    %s18 = scalar_lea.sflag [#allocation10], 1
    %19 = vsyncpa %s18, 0
    %20 = vsyncpa [#allocation13], 0
    %21 = vsyncpa [#allocation16], 0
    %22 = vsyncpa [#allocation8], 0
    %s23 = scalar_lea.sflag [#allocation8], 1
    %24 = vsyncpa %s23, 0
    loop: start=0, step=1, limit=10
    $region2: #{tpu_custom_call.1} parent=1 // loop_pre_header
      _
    $region3: #{tpu_custom_call.1} parent=1 // loop_header
      %s26 = sphi 0, %s30
      %p27 = scmp.ge.s32.totalorder %s26, 10
      %s33 = sphi 0, %s52
      %s34 = sphi 0, %s48
      %s35 = sphi 0, %s44
      %s36 = sphi 0, %s33
      %s37 = sphi 0, %s34
      %s38 = sphi 0, %s35
      %s39 = sphi 0, %s36
      %s40 = sphi 0, %s37
      %s41 = sphi 0, %s38
      %s57 = sphi 0, %s59
      %s60 = sphi 0, %s57
      %s61 = sphi 0, %s60
      %s77 = sphi 0, %s61
      %s85 = sphi 0, %s87
      %s88 = sphi 0, %s85
      %s89 = sphi 0, %s88
      %s105 = sphi 0, %s89
      %s113 = sphi 0, %s115
      %s116 = sphi 0, %s113
      %s117 = sphi 0, %s116
      %s133 = sphi 0, %s117
      %s137 = sphi 0, %s137
      %s139 = sphi 0, %s137
      %s140 = sphi 0, %s139
      %s154 = sphi 0, %s140
      %s158 = sphi 0, %s158
      %s160 = sphi 0, %s158
      %s161 = sphi 0, %s160
      %s175 = sphi 0, %s161
      %s179 = sphi 0, %s179
      %s181 = sphi 0, %s179
      %s182 = sphi 0, %s181
      %s196 = sphi 0, %s182
      %s200 = sphi 0, %s200
      %s202 = sphi 0, %s200
      %s203 = sphi 0, %s202
      %s217 = sphi 0, %s203
      %s221 = sphi 0, %s221
      %s223 = sphi 0, %s221
      %s224 = sphi 0, %s223
      %s238 = sphi 0, %s224
      %s242 = sphi 0, %s242
      %s244 = sphi 0, %s242
      %s245 = sphi 0, %s244
      %s259 = sphi 0, %s245
      %s267 = sphi 0, %s269
      %s270 = sphi 0, %s267
      %s271 = sphi 0, %s270
      %s287 = sphi 0, %s271
    $region4: #{tpu_custom_call.1} parent=1 // loop_header_branch
      %29 = sbr.rel (%p27) target = $region8
    $region5: #{tpu_custom_call.1} parent=1 // loop_body
      %s31 = ssub.s32 %s26, 1
      %s32 = ssub.s32 %s26, 2
      %s42 = sadd.s32 1, %s35
      %p43 = scmp.ge.s32.totalorder %s42, 2
      %s44 = scalar_select %p43, 0, %s42
      %s45 = sadd.s32 1, %s34
      %s46 = scalar_select %p43, %s45, %s34
      %p47 = scmp.ge.s32.totalorder %s46, 2
      %s48 = scalar_select %p47, 0, %s46
      %s49 = sadd.s32 1, %s33
      %s50 = scalar_select %p47, %s49, %s33
      %p51 = scmp.ge.s32.totalorder %s50, 2
      %s52 = scalar_select %p51, 0, %s50
      %s53 = ssub.s32 %s33, %s52
      %s54 = ssub.s32 %s34, %s48
      %s55 = sor.u32 %s53, %s54
      %p56 = scmp.eq.s32.totalorder %s55, 0
      %s58 = sadd.s32 %s57, 1
      %s59 = scalar_select %p56, %s57, %s58
      %p62 = pneg %p56
      %p63 = scmp.eq.s32.totalorder %s26, 7
      %p64 = por %p62, %p63
      %p65 = scmp.ne.s32.totalorder %s57, %s60
      %p66 = scmp.eq.s32.totalorder %s26, 0
      %p67 = por %p65, %p66
      %p68 = scmp.ne.s32.totalorder %s57, %s60
      %p69 = scmp.eq.s32.totalorder %s31, 7
      %p70 = por %p68, %p69
      %p71 = scmp.ne.s32.totalorder %s60, %s61
      %p72 = scmp.eq.s32.totalorder %s31, 0
      %p73 = por %p71, %p72
      %p74 = scmp.ne.s32.totalorder %s60, %s61
      %p75 = scmp.eq.s32.totalorder %s32, 7
      %p76 = por %p74, %p75
      %p78 = scmp.ne.s32.totalorder %s61, %s77
      %p79 = scmp.eq.s32.totalorder %s32, 0
      %p80 = por %p78, %p79
      %s81 = ssub.s32 %s33, %s52
      %s82 = ssub.s32 %s35, %s44
      %s83 = sor.u32 %s81, %s82
      %p84 = scmp.eq.s32.totalorder %s83, 0
      %s86 = sadd.s32 %s85, 1
      %s87 = scalar_select %p84, %s85, %s86
      %p90 = pneg %p84
      %p91 = scmp.eq.s32.totalorder %s26, 7
      %p92 = por %p90, %p91
      %p93 = scmp.ne.s32.totalorder %s85, %s88
      %p94 = scmp.eq.s32.totalorder %s26, 0
      %p95 = por %p93, %p94
      %p96 = scmp.ne.s32.totalorder %s85, %s88
      %p97 = scmp.eq.s32.totalorder %s31, 7
      %p98 = por %p96, %p97
      %p99 = scmp.ne.s32.totalorder %s88, %s89
      %p100 = scmp.eq.s32.totalorder %s31, 0
      %p101 = por %p99, %p100
      %p102 = scmp.ne.s32.totalorder %s88, %s89
      %p103 = scmp.eq.s32.totalorder %s32, 7
      %p104 = por %p102, %p103
      %p106 = scmp.ne.s32.totalorder %s89, %s105
      %p107 = scmp.eq.s32.totalorder %s32, 0
      %p108 = por %p106, %p107
      %s109 = ssub.s32 %s33, %s52
      %s110 = ssub.s32 %s35, %s44
      %s111 = sor.u32 %s109, %s110
      %p112 = scmp.eq.s32.totalorder %s111, 0
      %s114 = sadd.s32 %s113, 1
      %s115 = scalar_select %p112, %s113, %s114
      %p118 = pneg %p112
      %p119 = scmp.eq.s32.totalorder %s26, 7
      %p120 = por %p118, %p119
      %p121 = scmp.ne.s32.totalorder %s113, %s116
      %p122 = scmp.eq.s32.totalorder %s26, 0
      %p123 = por %p121, %p122
      %p124 = scmp.ne.s32.totalorder %s113, %s116
      %p125 = scmp.eq.s32.totalorder %s31, 7
      %p126 = por %p124, %p125
      %p127 = scmp.ne.s32.totalorder %s116, %s117
      %p128 = scmp.eq.s32.totalorder %s31, 0
      %p129 = por %p127, %p128
      %p130 = scmp.ne.s32.totalorder %s116, %s117
      %p131 = scmp.eq.s32.totalorder %s32, 7
      %p132 = por %p130, %p131
      %p134 = scmp.ne.s32.totalorder %s117, %s133
      %p135 = scmp.eq.s32.totalorder %s32, 0
      %p136 = por %p134, %p135
      %s138 = sadd.s32 %s137, 1
      %p141 = scmp.eq.s32.totalorder %s26, 7
      %p142 = scmp.ne.s32.totalorder %s137, %s139
      %p143 = scmp.eq.s32.totalorder %s26, 0
      %p144 = por %p142, %p143
      %p145 = scmp.ne.s32.totalorder %s137, %s139
      %p146 = scmp.eq.s32.totalorder %s31, 7
      %p147 = por %p145, %p146
      %p148 = scmp.ne.s32.totalorder %s139, %s140
      %p149 = scmp.eq.s32.totalorder %s31, 0
      %p150 = por %p148, %p149
      %p151 = scmp.ne.s32.totalorder %s139, %s140
      %p152 = scmp.eq.s32.totalorder %s32, 7
      %p153 = por %p151, %p152
      %p155 = scmp.ne.s32.totalorder %s140, %s154
      %p156 = scmp.eq.s32.totalorder %s32, 0
      %p157 = por %p155, %p156
      %s159 = sadd.s32 %s158, 1
      %p162 = scmp.eq.s32.totalorder %s26, 7
      %p163 = scmp.ne.s32.totalorder %s158, %s160
      %p164 = scmp.eq.s32.totalorder %s26, 0
      %p165 = por %p163, %p164
      %p166 = scmp.ne.s32.totalorder %s158, %s160
      %p167 = scmp.eq.s32.totalorder %s31, 7
      %p168 = por %p166, %p167
      %p169 = scmp.ne.s32.totalorder %s160, %s161
      %p170 = scmp.eq.s32.totalorder %s31, 0
      %p171 = por %p169, %p170
      %p172 = scmp.ne.s32.totalorder %s160, %s161
      %p173 = scmp.eq.s32.totalorder %s32, 7
      %p174 = por %p172, %p173
      %p176 = scmp.ne.s32.totalorder %s161, %s175
      %p177 = scmp.eq.s32.totalorder %s32, 0
      %p178 = por %p176, %p177
      %s180 = sadd.s32 %s179, 1
      %p183 = scmp.eq.s32.totalorder %s26, 7
      %p184 = scmp.ne.s32.totalorder %s179, %s181
      %p185 = scmp.eq.s32.totalorder %s26, 0
      %p186 = por %p184, %p185
      %p187 = scmp.ne.s32.totalorder %s179, %s181
      %p188 = scmp.eq.s32.totalorder %s31, 7
      %p189 = por %p187, %p188
      %p190 = scmp.ne.s32.totalorder %s181, %s182
      %p191 = scmp.eq.s32.totalorder %s31, 0
      %p192 = por %p190, %p191
      %p193 = scmp.ne.s32.totalorder %s181, %s182
      %p194 = scmp.eq.s32.totalorder %s32, 7
      %p195 = por %p193, %p194
      %p197 = scmp.ne.s32.totalorder %s182, %s196
      %p198 = scmp.eq.s32.totalorder %s32, 0
      %p199 = por %p197, %p198
      %s201 = sadd.s32 %s200, 1
      %p204 = scmp.eq.s32.totalorder %s26, 7
      %p205 = scmp.ne.s32.totalorder %s200, %s202
      %p206 = scmp.eq.s32.totalorder %s26, 0
      %p207 = por %p205, %p206
      %p208 = scmp.ne.s32.totalorder %s200, %s202
      %p209 = scmp.eq.s32.totalorder %s31, 7
      %p210 = por %p208, %p209
      %p211 = scmp.ne.s32.totalorder %s202, %s203
      %p212 = scmp.eq.s32.totalorder %s31, 0
      %p213 = por %p211, %p212
      %p214 = scmp.ne.s32.totalorder %s202, %s203
      %p215 = scmp.eq.s32.totalorder %s32, 7
      %p216 = por %p214, %p215
      %p218 = scmp.ne.s32.totalorder %s203, %s217
      %p219 = scmp.eq.s32.totalorder %s32, 0
      %p220 = por %p218, %p219
      %s222 = sadd.s32 %s221, 1
      %p225 = scmp.eq.s32.totalorder %s26, 7
      %p226 = scmp.ne.s32.totalorder %s221, %s223
      %p227 = scmp.eq.s32.totalorder %s26, 0
      %p228 = por %p226, %p227
      %p229 = scmp.ne.s32.totalorder %s221, %s223
      %p230 = scmp.eq.s32.totalorder %s31, 7
      %p231 = por %p229, %p230
      %p232 = scmp.ne.s32.totalorder %s223, %s224
      %p233 = scmp.eq.s32.totalorder %s31, 0
      %p234 = por %p232, %p233
      %p235 = scmp.ne.s32.totalorder %s223, %s224
      %p236 = scmp.eq.s32.totalorder %s32, 7
      %p237 = por %p235, %p236
      %p239 = scmp.ne.s32.totalorder %s224, %s238
      %p240 = scmp.eq.s32.totalorder %s32, 0
      %p241 = por %p239, %p240
      %s243 = sadd.s32 %s242, 1
      %p246 = scmp.eq.s32.totalorder %s26, 7
      %p247 = scmp.ne.s32.totalorder %s242, %s244
      %p248 = scmp.eq.s32.totalorder %s26, 0
      %p249 = por %p247, %p248
      %p250 = scmp.ne.s32.totalorder %s242, %s244
      %p251 = scmp.eq.s32.totalorder %s31, 7
      %p252 = por %p250, %p251
      %p253 = scmp.ne.s32.totalorder %s244, %s245
      %p254 = scmp.eq.s32.totalorder %s31, 0
      %p255 = por %p253, %p254
      %p256 = scmp.ne.s32.totalorder %s244, %s245
      %p257 = scmp.eq.s32.totalorder %s32, 7
      %p258 = por %p256, %p257
      %p260 = scmp.ne.s32.totalorder %s245, %s259
      %p261 = scmp.eq.s32.totalorder %s32, 0
      %p262 = por %p260, %p261
      %s263 = ssub.s32 %s33, %s52
      %s264 = ssub.s32 %s34, %s48
      %s265 = sor.u32 %s263, %s264
      %p266 = scmp.eq.s32.totalorder %s265, 0
      %s268 = sadd.s32 %s267, 1
      %s269 = scalar_select %p266, %s267, %s268
      %p272 = pneg %p266
      %p273 = scmp.eq.s32.totalorder %s26, 7
      %p274 = por %p272, %p273
      %p275 = scmp.ne.s32.totalorder %s267, %s270
      %p276 = scmp.eq.s32.totalorder %s26, 0
      %p277 = por %p275, %p276
      %p278 = scmp.ne.s32.totalorder %s267, %s270
      %p279 = scmp.eq.s32.totalorder %s31, 7
      %p280 = por %p278, %p279
      %p281 = scmp.ne.s32.totalorder %s270, %s271
      %p282 = scmp.eq.s32.totalorder %s31, 0
      %p283 = por %p281, %p282
      %p284 = scmp.ne.s32.totalorder %s270, %s271
      %p285 = scmp.eq.s32.totalorder %s32, 7
      %p286 = por %p284, %p285
      %p288 = scmp.ne.s32.totalorder %s271, %s287
      %p289 = scmp.eq.s32.totalorder %s32, 0
      %p290 = por %p288, %p289
      %p291 = scmp.le.s32.totalorder 1, %s26
      %p292 = scmp.lt.s32.totalorder %s26, 9
      %p293 = pnand %p291, %p292
      %p294 = pneg %p293
      // Predicated region
      $region9: #{tpu_custom_call.1} parent=5 // pred_check
        _
      $region10: #{tpu_custom_call.1} parent=5 // pred_check_branch
        %296 = sbr.rel (%p293) target = $region12
      $region11: #{tpu_custom_call.1} parent=5 // pred_region
        %s297 = ssub.s32 %s26, 1
        // Predicated region
        $region13: #{tpu_custom_call.1} parent=11 // pred_check
          %p298 = pneg %p150
        $region14: #{tpu_custom_call.1} parent=11 // pred_check_branch
          %300 = sbr.rel (%p298) target = $region16
        $region15: #{tpu_custom_call.1} parent=11 // pred_region
          %s302 = ssub.s32 1024, 1024
          %303 = vsyncadd [#allocation13], %s302
          %s304 = sshll.u32 [#allocation12], 4
          %s305 = int_to_ptr.vmem [resolvable:$true] %s304
          %310 = dma.hbm_to_vmem [thread:$0]  %s3, 1024, %s305, [#allocation13], 64, 64, 4
        $region16: #{tpu_custom_call.1} parent=11 // pred_fallthru
          _
        // Predicated region
        $region17: #{tpu_custom_call.1} parent=11 // pred_check
          %p311 = pneg %p171
        $region18: #{tpu_custom_call.1} parent=11 // pred_check_branch
          %313 = sbr.rel (%p311) target = $region20
        $region19: #{tpu_custom_call.1} parent=11 // pred_region
          _
        $region20: #{tpu_custom_call.1} parent=11 // pred_fallthru
          _
        // Predicated region
        $region21: #{tpu_custom_call.1} parent=11 // pred_check
          %p314 = pneg %p192
        $region22: #{tpu_custom_call.1} parent=11 // pred_check_branch
          %316 = sbr.rel (%p314) target = $region24
        $region23: #{tpu_custom_call.1} parent=11 // pred_region
          %s318 = ssub.s32 1024, 1024
          %319 = vsyncadd [#allocation13], %s318
          %s320 = sshll.u32 [#allocation14], 4
          %s321 = int_to_ptr.vmem [resolvable:$true] %s320
          %326 = dma.hbm_to_vmem [thread:$0]  %s5, 1024, %s321, [#allocation13], 64, 64, 4
        $region24: #{tpu_custom_call.1} parent=11 // pred_fallthru
          _
        // Predicated region
        $region25: #{tpu_custom_call.1} parent=11 // pred_check
          %p327 = pneg %p213
        $region26: #{tpu_custom_call.1} parent=11 // pred_check_branch
          %329 = sbr.rel (%p327) target = $region28
        $region27: #{tpu_custom_call.1} parent=11 // pred_region
          _
        $region28: #{tpu_custom_call.1} parent=11 // pred_fallthru
          _
        // Predicated region
        $region29: #{tpu_custom_call.1} parent=11 // pred_check
          %p330 = pneg %p234
        $region30: #{tpu_custom_call.1} parent=11 // pred_check_branch
          %332 = sbr.rel (%p330) target = $region32
        $region31: #{tpu_custom_call.1} parent=11 // pred_region
          %s334 = ssub.s32 1024, 1024
          %335 = vsyncadd [#allocation16], %s334
          %s336 = sshll.u32 [#allocation15], 4
          %s337 = int_to_ptr.vmem [resolvable:$true] %s336
          %342 = dma.hbm_to_vmem [thread:$0]  %s7, 1024, %s337, [#allocation16], 64, 64, 4
        $region32: #{tpu_custom_call.1} parent=11 // pred_fallthru
          _
        // Predicated region
        $region33: #{tpu_custom_call.1} parent=11 // pred_check
          %p343 = pneg %p255
        $region34: #{tpu_custom_call.1} parent=11 // pred_check_branch
          %345 = sbr.rel (%p343) target = $region36
        $region35: #{tpu_custom_call.1} parent=11 // pred_region
          _
        $region36: #{tpu_custom_call.1} parent=11 // pred_fallthru
          _
      $region12: #{tpu_custom_call.1} parent=5 // pred_fallthru
        _
      %p346 = scmp.lt.s32.totalorder %s26, 8
      // Predicated region
      $region37: #{tpu_custom_call.1} parent=5 // pred_check
        %p347 = pneg %p346
      $region38: #{tpu_custom_call.1} parent=5 // pred_check_branch
        %349 = sbr.rel (%p347) target = $region40
      $region39: #{tpu_custom_call.1} parent=5 // pred_region
        // Predicated region
        $region41: #{tpu_custom_call.1} parent=39 // pred_check
          %p350 = pneg %p67
        $region42: #{tpu_custom_call.1} parent=39 // pred_check_branch
          %352 = sbr.rel (%p350) target = $region44
        $region43: #{tpu_custom_call.1} parent=39 // pred_region
          %s353 = sand.u32 %s57, 1
          %s354 = scalar_lea.sflag [#allocation7], %s353
          %s355 = sand.u32 %s57, 1
          %s356 = smul.addr %s355, 64
          %s357 = scalar_lea.vmem [#allocation6], %s356
          %s358 = smul.u32 16, %s34
          %s360 = ssub.s32 1024, 1024
          %361 = vsyncadd %s354, %s360
          %s362 = smul.addr %s33, 32
          %s363 = sadd.s32 %s358, %s362
          %s364 = smul.addr %s363, 64
          %s365 = scalar_lea.hbm %s0, %s364
          %s366 = sshll.u32 %s357, 4
          %s367 = int_to_ptr.vmem [resolvable:$true] %s366
          %372 = dma.hbm_to_vmem [thread:$0]  %s365, 1024, %s367, %s354, 64, 64, 4
        $region44: #{tpu_custom_call.1} parent=39 // pred_fallthru
          _
        // Predicated region
        $region45: #{tpu_custom_call.1} parent=39 // pred_check
          %p373 = pneg %p95
        $region46: #{tpu_custom_call.1} parent=39 // pred_check_branch
          %375 = sbr.rel (%p373) target = $region48
        $region47: #{tpu_custom_call.1} parent=39 // pred_region
          %s376 = sand.u32 %s26, 1
          %s377 = scalar_lea.sflag [#allocation10], %s376
          %s378 = sand.u32 %s85, 1
          %s379 = smul.addr %s378, 64
          %s380 = scalar_lea.vmem [#allocation9], %s379
          %s381 = smul.u32 16, %s35
          %s383 = ssub.s32 1024, 1024
          %384 = vsyncadd %s377, %s383
          %s385 = smul.addr %s33, 32
          %s386 = sadd.s32 %s381, %s385
          %s387 = smul.addr %s386, 64
          %s388 = scalar_lea.hbm %s1, %s387
          %s389 = sshll.u32 %s380, 4
          %s390 = int_to_ptr.vmem [resolvable:$true] %s389
          %395 = dma.hbm_to_vmem [thread:$0]  %s388, 1024, %s390, %s377, 64, 64, 4
        $region48: #{tpu_custom_call.1} parent=39 // pred_fallthru
          _
        // Predicated region
        $region49: #{tpu_custom_call.1} parent=39 // pred_check
          %p396 = pneg %p123
        $region50: #{tpu_custom_call.1} parent=39 // pred_check_branch
          %398 = sbr.rel (%p396) target = $region52
        $region51: #{tpu_custom_call.1} parent=39 // pred_region
          %s399 = sand.u32 %s26, 1
          %s400 = scalar_lea.sflag [#allocation10], %s399
          %s401 = sand.u32 %s113, 1
          %s402 = smul.addr %s401, 64
          %s403 = scalar_lea.vmem [#allocation11], %s402
          %s404 = smul.u32 16, %s35
          %s406 = ssub.s32 1024, 1024
          %407 = vsyncadd %s400, %s406
          %s408 = smul.addr %s33, 32
          %s409 = sadd.s32 %s404, %s408
          %s410 = smul.addr %s409, 64
          %s411 = scalar_lea.hbm %s2, %s410
          %s412 = sshll.u32 %s403, 4
          %s413 = int_to_ptr.vmem [resolvable:$true] %s412
          %418 = dma.hbm_to_vmem [thread:$0]  %s411, 1024, %s413, %s400, 64, 64, 4
        $region52: #{tpu_custom_call.1} parent=39 // pred_fallthru
          _
      $region40: #{tpu_custom_call.1} parent=5 // pred_fallthru
        _
      %p419 = scmp.le.s32.totalorder 1, %s26
      %p420 = scmp.lt.s32.totalorder %s26, 9
      %p421 = pnand %p419, %p420
      %p422 = pneg %p421
      // Predicated region
      $region53: #{tpu_custom_call.1} parent=5 // pred_check
        _
      $region54: #{tpu_custom_call.1} parent=5 // pred_check_branch
        %424 = sbr.rel (%p421) target = $region56
      $region55: #{tpu_custom_call.1} parent=5 // pred_region
        %s425 = ssub.s32 %s26, 1
        %s426 = sand.u32 %s60, 1
        %s427 = scalar_lea.sflag [#allocation7], %s426
        %s428 = sand.u32 %s60, 1
        %s429 = smul.addr %s428, 64
        %s430 = scalar_lea.vmem [#allocation6], %s429
        // Predicated region
        $region57: #{tpu_custom_call.1} parent=55 // pred_check
          %p431 = pneg %p73
        $region58: #{tpu_custom_call.1} parent=55 // pred_check_branch
          %433 = sbr.rel (%p431) target = $region60
        $region59: #{tpu_custom_call.1} parent=55 // pred_region
          %434 = dma.done %s427, 1024
        $region60: #{tpu_custom_call.1} parent=55 // pred_fallthru
          _
        %s435 = sand.u32 %s31, 1
        %s436 = scalar_lea.sflag [#allocation10], %s435
        %s437 = sand.u32 %s88, 1
        %s438 = smul.addr %s437, 64
        %s439 = scalar_lea.vmem [#allocation9], %s438
        // Predicated region
        $region61: #{tpu_custom_call.1} parent=55 // pred_check
          %p440 = pneg %p101
        $region62: #{tpu_custom_call.1} parent=55 // pred_check_branch
          %442 = sbr.rel (%p440) target = $region64
        $region63: #{tpu_custom_call.1} parent=55 // pred_region
          %443 = dma.done %s436, 1024
        $region64: #{tpu_custom_call.1} parent=55 // pred_fallthru
          _
        %s444 = sand.u32 %s31, 1
        %s445 = scalar_lea.sflag [#allocation10], %s444
        %s446 = sand.u32 %s116, 1
        %s447 = smul.addr %s446, 64
        %s448 = scalar_lea.vmem [#allocation11], %s447
        // Predicated region
        $region65: #{tpu_custom_call.1} parent=55 // pred_check
          %p449 = pneg %p129
        $region66: #{tpu_custom_call.1} parent=55 // pred_check_branch
          %451 = sbr.rel (%p449) target = $region68
        $region67: #{tpu_custom_call.1} parent=55 // pred_region
          %452 = dma.done %s445, 1024
        $region68: #{tpu_custom_call.1} parent=55 // pred_fallthru
          _
        // Predicated region
        $region69: #{tpu_custom_call.1} parent=55 // pred_check
          %p453 = pneg %p150
        $region70: #{tpu_custom_call.1} parent=55 // pred_check_branch
          %455 = sbr.rel (%p453) target = $region72
        $region71: #{tpu_custom_call.1} parent=55 // pred_region
          %456 = dma.done [#allocation13], 1024
        $region72: #{tpu_custom_call.1} parent=55 // pred_fallthru
          _
        // Predicated region
        $region73: #{tpu_custom_call.1} parent=55 // pred_check
          %p457 = pneg %p192
        $region74: #{tpu_custom_call.1} parent=55 // pred_check_branch
          %459 = sbr.rel (%p457) target = $region76
        $region75: #{tpu_custom_call.1} parent=55 // pred_region
          %460 = dma.done [#allocation13], 1024
        $region76: #{tpu_custom_call.1} parent=55 // pred_fallthru
          _
        // Predicated region
        $region77: #{tpu_custom_call.1} parent=55 // pred_check
          %p461 = pneg %p234
        $region78: #{tpu_custom_call.1} parent=55 // pred_check_branch
          %463 = sbr.rel (%p461) target = $region80
        $region79: #{tpu_custom_call.1} parent=55 // pred_region
          %464 = dma.done [#allocation16], 1024
        $region80: #{tpu_custom_call.1} parent=55 // pred_fallthru
          _
        %s465 = sand.u32 %s60, 1
        %s466 = scalar_lea.sflag [#allocation7], %s465
        %s467 = sand.u32 %s60, 1
        %s468 = smul.addr %s467, 64
        %s469 = scalar_lea.vmem [#allocation6], %s468
        %p470 = pneg %p73
        %p471 = pneg %p70
        %s472 = sand.u32 %s31, 1
        %s473 = scalar_lea.sflag [#allocation10], %s472
        %s474 = sand.u32 %s88, 1
        %s475 = smul.addr %s474, 64
        %s476 = scalar_lea.vmem [#allocation9], %s475
        %p477 = pneg %p101
        %p478 = pneg %p98
        %s479 = sand.u32 %s31, 1
        %s480 = scalar_lea.sflag [#allocation10], %s479
        %s481 = sand.u32 %s116, 1
        %s482 = smul.addr %s481, 64
        %s483 = scalar_lea.vmem [#allocation11], %s482
        %p484 = pneg %p129
        %p485 = pneg %p126
        %p486 = pneg %p150
        %p487 = pneg %p147
        %p488 = pneg %p171
        %p489 = pneg %p168
        %p490 = pneg %p192
        %p491 = pneg %p189
        %p492 = pneg %p213
        %p493 = pneg %p210
        %p494 = pneg %p234
        %p495 = pneg %p231
        %p496 = pneg %p255
        %p497 = pneg %p252
        %p498 = pneg %p283
        %p499 = pneg %p280
        %s500 = sand.u32 %s270, 1
        %s501 = scalar_lea.sflag [#allocation8], %s500
        %s502 = sand.u32 %s270, 1
        %s503 = smul.addr %s502, 128
        %s504 = scalar_lea.vmem [#allocation17], %s503
        %s505 = smul.u32 16, %s37
        %s506 = smul.u32 16, %s38
        %s507 = smul.u32 16, %s38
        %s508 = smul.u32 16, %s37
        %p510 = scmp.eq.s32.totalorder %s38, 0
        // Predicated region
        $region81: #{tpu_custom_call.1} parent=55 // pred_check
          %p511 = pneg %p510
        $region82: #{tpu_custom_call.1} parent=55 // pred_check_branch
          %513 = sbr.rel (%p511) target = $region84
        $region83: #{tpu_custom_call.1} parent=55 // pred_region
          %v514 = vld [vmem:[%s430] sm:$0xf]
          %v515 = vld [vmem:[%s430 + $0x4] sm:$0xf]
          %v516 = vld [vmem:[%s430 + $0x8] sm:$0xf]
          %v517 = vld [vmem:[%s430 + $0xc] sm:$0xf]
          %v518 = vld [vmem:[%s430 + $0x10] sm:$0xf]
          %v519 = vld [vmem:[%s430 + $0x14] sm:$0xf]
          %v520 = vld [vmem:[%s430 + $0x18] sm:$0xf]
          %v521 = vld [vmem:[%s430 + $0x1c] sm:$0xf]
          %v522 = vld [vmem:[%s430 + $0x20] sm:$0xf]
          %v523 = vld [vmem:[%s430 + $0x24] sm:$0xf]
          %v524 = vld [vmem:[%s430 + $0x28] sm:$0xf]
          %v525 = vld [vmem:[%s430 + $0x2c] sm:$0xf]
          %v526 = vld [vmem:[%s430 + $0x30] sm:$0xf]
          %v527 = vld [vmem:[%s430 + $0x34] sm:$0xf]
          %v528 = vld [vmem:[%s430 + $0x38] sm:$0xf]
          %v529 = vld [vmem:[%s430 + $0x3c] sm:$0xf]
          %v530 = vld [vmem:[#allocation12] sm:$0xf]
          %v531 = vld [vmem:[#allocation12 + $0x4] sm:$0xf]
          %v532 = vld [vmem:[#allocation12 + $0x8] sm:$0xf]
          %v533 = vld [vmem:[#allocation12 + $0xc] sm:$0xf]
          %v534 = vld [vmem:[#allocation12 + $0x10] sm:$0xf]
          %v535 = vld [vmem:[#allocation12 + $0x14] sm:$0xf]
          %v536 = vld [vmem:[#allocation12 + $0x18] sm:$0xf]
          %v537 = vld [vmem:[#allocation12 + $0x1c] sm:$0xf]
          %v538 = vld [vmem:[#allocation12 + $0x20] sm:$0xf]
          %v539 = vld [vmem:[#allocation12 + $0x24] sm:$0xf]
          %v540 = vld [vmem:[#allocation12 + $0x28] sm:$0xf]
          %v541 = vld [vmem:[#allocation12 + $0x2c] sm:$0xf]
          %v542 = vld [vmem:[#allocation12 + $0x30] sm:$0xf]
          %v543 = vld [vmem:[#allocation12 + $0x34] sm:$0xf]
          %v544 = vld [vmem:[#allocation12 + $0x38] sm:$0xf]
          %v545 = vld [vmem:[#allocation12 + $0x3c] sm:$0xf]
          %v546 = vld [vmem:[%s4] sm:$0x1]
          %v548 = vlaneseq
          %v549 = vshrl.u32 %v548, 7
          %v550 = vsub.s32 0, %v549
          %v551 = vrot.slane %v546, %v550
          %v569 = vunpack.c.l.b16 %v514
          %v570 = vunpack.c.l.b16 %v515
          %v571 = vunpack.c.l.b16 %v516
          %v572 = vunpack.c.l.b16 %v517
          %v573 = vunpack.c.l.b16 %v518
          %v574 = vunpack.c.l.b16 %v519
          %v575 = vunpack.c.l.b16 %v520
          %v576 = vunpack.c.l.b16 %v521
          %v577 = vunpack.c.l.b16 %v522
          %v578 = vunpack.c.l.b16 %v523
          %v579 = vunpack.c.l.b16 %v524
          %v580 = vunpack.c.l.b16 %v525
          %v581 = vunpack.c.l.b16 %v526
          %v582 = vunpack.c.l.b16 %v527
          %v583 = vunpack.c.l.b16 %v528
          %v584 = vunpack.c.l.b16 %v529
          %v585 = vpack.c.b16 %v570, %v569
          %v586 = vpack.c.b16 %v572, %v571
          %v587 = vpack.c.b16 %v574, %v573
          %v588 = vpack.c.b16 %v576, %v575
          %v589 = vpack.c.b16 %v578, %v577
          %v590 = vpack.c.b16 %v580, %v579
          %v591 = vpack.c.b16 %v582, %v581
          %v592 = vpack.c.b16 %v584, %v583
          %v617 = vunpack.c.l.b16 %v530
          %v618 = vunpack.c.l.b16 %v531
          %v619 = vunpack.c.l.b16 %v532
          %v620 = vunpack.c.l.b16 %v533
          %v621 = vunpack.c.l.b16 %v534
          %v622 = vunpack.c.l.b16 %v535
          %v623 = vunpack.c.l.b16 %v536
          %v624 = vunpack.c.l.b16 %v537
          %v625 = vunpack.c.l.b16 %v538
          %v626 = vunpack.c.l.b16 %v539
          %v627 = vunpack.c.l.b16 %v540
          %v628 = vunpack.c.l.b16 %v541
          %v629 = vunpack.c.l.b16 %v542
          %v630 = vunpack.c.l.b16 %v543
          %v631 = vunpack.c.l.b16 %v544
          %v632 = vunpack.c.l.b16 %v545
          %v633 = vpack.c.b16 %v618, %v617
          %v634 = vpack.c.b16 %v620, %v619
          %v635 = vpack.c.b16 %v622, %v621
          %v636 = vpack.c.b16 %v624, %v623
          %v637 = vpack.c.b16 %v626, %v625
          %v638 = vpack.c.b16 %v628, %v627
          %v639 = vpack.c.b16 %v630, %v629
          %v640 = vpack.c.b16 %v632, %v631
          %649 = vmatprep.subr.bf16.mxu0 0
          %650 = vmatpush1.bf16.msra.mxu0 %v633
          %651 = vmatprep.subr.bf16.mxu0 0
          %652 = vmatpush1.bf16.msra.mxu0 %v634
          %653 = vmatprep.subr.bf16.mxu0 0
          %654 = vmatpush1.bf16.msra.mxu0 %v635
          %655 = vmatprep.subr.bf16.mxu0 0
          %656 = vmatpush1.bf16.msra.mxu0 %v636
          %657 = vmatprep.subr.bf16.mxu0 0
          %658 = vmatpush1.bf16.msra.mxu0 %v637
          %659 = vmatprep.subr.bf16.mxu0 0
          %660 = vmatpush1.bf16.msra.mxu0 %v638
          %661 = vmatprep.subr.bf16.mxu0 0
          %662 = vmatpush1.bf16.msra.mxu0 %v639
          %663 = vmatprep.subr.bf16.mxu0 0
          %664 = vmatpush1.bf16.msra.mxu0 %v640
          %665 = vmatprep.subr.bf16.mxu0 0
          %666 = vmatpush1.bf16.msra.mxu0 0
          %667 = vmatprep.subr.bf16.mxu0 0
          %668 = vmatpush1.bf16.msra.mxu0 0
          %669 = vmatprep.subr.bf16.mxu0 0
          %670 = vmatpush1.bf16.msra.mxu0 0
          %671 = vmatprep.subr.bf16.mxu0 0
          %672 = vmatpush1.bf16.msra.mxu0 0
          %673 = vmatprep.subr.bf16.mxu0 0
          %674 = vmatpush1.bf16.msra.mxu0 0
          %675 = vmatprep.subr.bf16.mxu0 0
          %676 = vmatpush1.bf16.msra.mxu0 0
          %677 = vmatprep.subr.bf16.mxu0 0
          %678 = vmatpush1.bf16.msra.mxu0 0
          %679 = vmatprep.subr.bf16.mxu0 0
          %680 = vmatpush1.bf16.msra.mxu0 0
          %681 = vmatprep.mubr.bf16.mxu0 0
          %682 = vmatmul.mubr.bf16.gmra.mrb[0].mxu0 %v585
          %v683 = vpop.f32.mrb[0].mxu0
          %v684 = vadd.f32 %v551, %v683
          %v685 = vpop.f32.mrb[0].mxu0
          %v686 = vpop.f32.mrb[0].mxu0
          %v687 = vadd.f32 %v551, %v686
          %v688 = vpop.f32.mrb[0].mxu0
          %689 = vmatprep.mubr.bf16.mxu0 0
          %690 = vmatmul.mubr.bf16.gmra.mrb[0].mxu0 %v586
          %v691 = vpop.f32.mrb[0].mxu0
          %v692 = vadd.f32 %v551, %v691
          %v693 = vpop.f32.mrb[0].mxu0
          %v694 = vpop.f32.mrb[0].mxu0
          %v695 = vadd.f32 %v551, %v694
          %v696 = vpop.f32.mrb[0].mxu0
          %697 = vmatprep.mubr.bf16.mxu0 0
          %698 = vmatmul.mubr.bf16.gmra.mrb[0].mxu0 %v587
          %v699 = vpop.f32.mrb[0].mxu0
          %v700 = vadd.f32 %v551, %v699
          %v701 = vpop.f32.mrb[0].mxu0
          %v702 = vpop.f32.mrb[0].mxu0
          %v703 = vadd.f32 %v551, %v702
          %v704 = vpop.f32.mrb[0].mxu0
          %705 = vmatprep.mubr.bf16.mxu0 0
          %706 = vmatmul.mubr.bf16.gmra.mrb[0].mxu0 %v588
          %v707 = vpop.f32.mrb[0].mxu0
          %v708 = vadd.f32 %v551, %v707
          %v709 = vpop.f32.mrb[0].mxu0
          %v710 = vpop.f32.mrb[0].mxu0
          %v711 = vadd.f32 %v551, %v710
          %v712 = vpop.f32.mrb[0].mxu0
          %713 = vmatprep.mubr.bf16.mxu0 0
          %714 = vmatmul.mubr.bf16.gmra.mrb[0].mxu0 %v589
          %v715 = vpop.f32.mrb[0].mxu0
          %v716 = vadd.f32 %v551, %v715
          %v717 = vpop.f32.mrb[0].mxu0
          %v718 = vpop.f32.mrb[0].mxu0
          %v719 = vadd.f32 %v551, %v718
          %v720 = vpop.f32.mrb[0].mxu0
          %721 = vmatprep.mubr.bf16.mxu0 0
          %722 = vmatmul.mubr.bf16.gmra.mrb[0].mxu0 %v590
          %v723 = vpop.f32.mrb[0].mxu0
          %v724 = vadd.f32 %v551, %v723
          %v725 = vpop.f32.mrb[0].mxu0
          %v726 = vpop.f32.mrb[0].mxu0
          %v727 = vadd.f32 %v551, %v726
          %v728 = vpop.f32.mrb[0].mxu0
          %729 = vmatprep.mubr.bf16.mxu0 0
          %730 = vmatmul.mubr.bf16.gmra.mrb[0].mxu0 %v591
          %v731 = vpop.f32.mrb[0].mxu0
          %v732 = vadd.f32 %v551, %v731
          %v733 = vpop.f32.mrb[0].mxu0
          %v734 = vpop.f32.mrb[0].mxu0
          %v735 = vadd.f32 %v551, %v734
          %v736 = vpop.f32.mrb[0].mxu0
          %737 = vmatprep.mubr.bf16.mxu0 0
          %738 = vmatmul.mubr.bf16.gmra.mrb[0].mxu0 %v592
          %v739 = vpop.f32.mrb[0].mxu0
          %v740 = vadd.f32 %v551, %v739
          %v741 = vpop.f32.mrb[0].mxu0
          %v742 = vpop.f32.mrb[0].mxu0
          %v743 = vadd.f32 %v551, %v742
          %v744 = vpop.f32.mrb[0].mxu0
          %745 = vdwg.mxu0
          %v746 = vmul.f32 %v684, 0.088388346
          %v747 = vmul.f32 %v687, 0.088388346
          %v748 = vmul.f32 %v692, 0.088388346
          %v749 = vmul.f32 %v695, 0.088388346
          %v750 = vmul.f32 %v700, 0.088388346
          %v751 = vmul.f32 %v703, 0.088388346
          %v752 = vmul.f32 %v708, 0.088388346
          %v753 = vmul.f32 %v711, 0.088388346
          %v754 = vmul.f32 %v716, 0.088388346
          %v755 = vmul.f32 %v719, 0.088388346
          %v756 = vmul.f32 %v724, 0.088388346
          %v757 = vmul.f32 %v727, 0.088388346
          %v758 = vmul.f32 %v732, 0.088388346
          %v759 = vmul.f32 %v735, 0.088388346
          %v760 = vmul.f32 %v740, 0.088388346
          %v761 = vmul.f32 %v743, 0.088388346
          %v762 = vpack.c.bf16 %v747, %v746
          %v763 = vpack.c.bf16 %v749, %v748
          %v764 = vpack.c.bf16 %v751, %v750
          %v765 = vpack.c.bf16 %v753, %v752
          %v766 = vpack.c.bf16 %v755, %v754
          %v767 = vpack.c.bf16 %v757, %v756
          %v768 = vpack.c.bf16 %v759, %v758
          %v769 = vpack.c.bf16 %v761, %v760
          %770 = vst [vmem:[#allocation2] sm:$0xff] %v762
          %771 = vst [vmem:[#allocation2 + $0x8] sm:$0xff] %v763
          %772 = vst [vmem:[#allocation2 + $0x10] sm:$0xff] %v764
          %773 = vst [vmem:[#allocation2 + $0x18] sm:$0xff] %v765
          %774 = vst [vmem:[#allocation2 + $0x20] sm:$0xff] %v766
          %775 = vst [vmem:[#allocation2 + $0x28] sm:$0xff] %v767
          %776 = vst [vmem:[#allocation2 + $0x30] sm:$0xff] %v768
          %777 = vst [vmem:[#allocation2 + $0x38] sm:$0xff] %v769
          %vm778 = vcmask 7168
          %779 = vst.msk [vmem:[#allocation3] sm:$0xff] %vm778, -inf
          %780 = vst.msk [vmem:[#allocation3 + $0x8] sm:$0xff] %vm778, -inf
          %781 = vst.msk [vmem:[#allocation3 + $0x10] sm:$0xff] %vm778, -inf
          %782 = vst.msk [vmem:[#allocation3 + $0x18] sm:$0xff] %vm778, -inf
          %783 = vst.msk [vmem:[#allocation3 + $0x20] sm:$0xff] %vm778, -inf
          %784 = vst.msk [vmem:[#allocation3 + $0x28] sm:$0xff] %vm778, -inf
          %785 = vst.msk [vmem:[#allocation3 + $0x30] sm:$0xff] %vm778, -inf
          %786 = vst.msk [vmem:[#allocation3 + $0x38] sm:$0xff] %vm778, -inf
          %787 = vst.msk [vmem:[#allocation3 + $0x40] sm:$0xff] %vm778, -inf
          %788 = vst.msk [vmem:[#allocation3 + $0x48] sm:$0xff] %vm778, -inf
          %789 = vst.msk [vmem:[#allocation3 + $0x50] sm:$0xff] %vm778, -inf
          %790 = vst.msk [vmem:[#allocation3 + $0x58] sm:$0xff] %vm778, -inf
          %791 = vst.msk [vmem:[#allocation3 + $0x60] sm:$0xff] %vm778, -inf
          %792 = vst.msk [vmem:[#allocation3 + $0x68] sm:$0xff] %vm778, -inf
          %793 = vst.msk [vmem:[#allocation3 + $0x70] sm:$0xff] %vm778, -inf
          %794 = vst.msk [vmem:[#allocation3 + $0x78] sm:$0xff] %vm778, -inf
          %795 = vst.msk [vmem:[#allocation4] sm:$0xff] %vm778, 0.0
          %796 = vst.msk [vmem:[#allocation4 + $0x8] sm:$0xff] %vm778, 0.0
          %797 = vst.msk [vmem:[#allocation4 + $0x10] sm:$0xff] %vm778, 0.0
          %798 = vst.msk [vmem:[#allocation4 + $0x18] sm:$0xff] %vm778, 0.0
          %799 = vst.msk [vmem:[#allocation4 + $0x20] sm:$0xff] %vm778, 0.0
          %800 = vst.msk [vmem:[#allocation4 + $0x28] sm:$0xff] %vm778, 0.0
          %801 = vst.msk [vmem:[#allocation4 + $0x30] sm:$0xff] %vm778, 0.0
          %802 = vst.msk [vmem:[#allocation4 + $0x38] sm:$0xff] %vm778, 0.0
          %803 = vst.msk [vmem:[#allocation4 + $0x40] sm:$0xff] %vm778, 0.0
          %804 = vst.msk [vmem:[#allocation4 + $0x48] sm:$0xff] %vm778, 0.0
          %805 = vst.msk [vmem:[#allocation4 + $0x50] sm:$0xff] %vm778, 0.0
          %806 = vst.msk [vmem:[#allocation4 + $0x58] sm:$0xff] %vm778, 0.0
          %807 = vst.msk [vmem:[#allocation4 + $0x60] sm:$0xff] %vm778, 0.0
          %808 = vst.msk [vmem:[#allocation4 + $0x68] sm:$0xff] %vm778, 0.0
          %809 = vst.msk [vmem:[#allocation4 + $0x70] sm:$0xff] %vm778, 0.0
          %810 = vst.msk [vmem:[#allocation4 + $0x78] sm:$0xff] %vm778, 0.0
          %811 = vst [vmem:[#allocation5] sm:$0xff] 0.0
          %812 = vst [vmem:[#allocation5 + $0x8] sm:$0xff] 0.0
          %813 = vst [vmem:[#allocation5 + $0x10] sm:$0xff] 0.0
          %814 = vst [vmem:[#allocation5 + $0x18] sm:$0xff] 0.0
          %815 = vst [vmem:[#allocation5 + $0x20] sm:$0xff] 0.0
          %816 = vst [vmem:[#allocation5 + $0x28] sm:$0xff] 0.0
          %817 = vst [vmem:[#allocation5 + $0x30] sm:$0xff] 0.0
          %818 = vst [vmem:[#allocation5 + $0x38] sm:$0xff] 0.0
          %819 = vst [vmem:[#allocation5 + $0x40] sm:$0xff] 0.0
          %820 = vst [vmem:[#allocation5 + $0x48] sm:$0xff] 0.0
          %821 = vst [vmem:[#allocation5 + $0x50] sm:$0xff] 0.0
          %822 = vst [vmem:[#allocation5 + $0x58] sm:$0xff] 0.0
          %823 = vst [vmem:[#allocation5 + $0x60] sm:$0xff] 0.0
          %824 = vst [vmem:[#allocation5 + $0x68] sm:$0xff] 0.0
          %825 = vst [vmem:[#allocation5 + $0x70] sm:$0xff] 0.0
          %826 = vst [vmem:[#allocation5 + $0x78] sm:$0xff] 0.0
        $region84: #{tpu_custom_call.1} parent=55 // pred_fallthru
          _
        %v827 = vld [vmem:[%s439] sm:$0xf]
        %v828 = vld [vmem:[%s439 + $0x4] sm:$0xf]
        %v829 = vld [vmem:[%s439 + $0x8] sm:$0xf]
        %v830 = vld [vmem:[%s439 + $0xc] sm:$0xf]
        %v831 = vld [vmem:[%s439 + $0x10] sm:$0xf]
        %v832 = vld [vmem:[%s439 + $0x14] sm:$0xf]
        %v833 = vld [vmem:[%s439 + $0x18] sm:$0xf]
        %v834 = vld [vmem:[%s439 + $0x1c] sm:$0xf]
        %v835 = vld [vmem:[%s439 + $0x20] sm:$0xf]
        %v836 = vld [vmem:[%s439 + $0x24] sm:$0xf]
        %v837 = vld [vmem:[%s439 + $0x28] sm:$0xf]
        %v838 = vld [vmem:[%s439 + $0x2c] sm:$0xf]
        %v839 = vld [vmem:[%s439 + $0x30] sm:$0xf]
        %v840 = vld [vmem:[%s439 + $0x34] sm:$0xf]
        %v841 = vld [vmem:[%s439 + $0x38] sm:$0xf]
        %v842 = vld [vmem:[%s439 + $0x3c] sm:$0xf]
        %v843 = vld [vmem:[#allocation14] sm:$0xf]
        %v844 = vld [vmem:[#allocation14 + $0x4] sm:$0xf]
        %v845 = vld [vmem:[#allocation14 + $0x8] sm:$0xf]
        %v846 = vld [vmem:[#allocation14 + $0xc] sm:$0xf]
        %v847 = vld [vmem:[#allocation14 + $0x10] sm:$0xf]
        %v848 = vld [vmem:[#allocation14 + $0x14] sm:$0xf]
        %v849 = vld [vmem:[#allocation14 + $0x18] sm:$0xf]
        %v850 = vld [vmem:[#allocation14 + $0x1c] sm:$0xf]
        %v851 = vld [vmem:[#allocation14 + $0x20] sm:$0xf]
        %v852 = vld [vmem:[#allocation14 + $0x24] sm:$0xf]
        %v853 = vld [vmem:[#allocation14 + $0x28] sm:$0xf]
        %v854 = vld [vmem:[#allocation14 + $0x2c] sm:$0xf]
        %v855 = vld [vmem:[#allocation14 + $0x30] sm:$0xf]
        %v856 = vld [vmem:[#allocation14 + $0x34] sm:$0xf]
        %v857 = vld [vmem:[#allocation14 + $0x38] sm:$0xf]
        %v858 = vld [vmem:[#allocation14 + $0x3c] sm:$0xf]
        %v859 = vld [vmem:[%s6] sm:$0x1]
        %v861 = vlaneseq
        %v862 = vshrl.u32 %v861, 7
        %v863 = vsub.s32 0, %v862
        %v864 = vrot.slane %v859, %v863
        %v882 = vunpack.c.l.b16 %v827
        %v883 = vunpack.c.l.b16 %v828
        %v884 = vunpack.c.l.b16 %v829
        %v885 = vunpack.c.l.b16 %v830
        %v886 = vunpack.c.l.b16 %v831
        %v887 = vunpack.c.l.b16 %v832
        %v888 = vunpack.c.l.b16 %v833
        %v889 = vunpack.c.l.b16 %v834
        %v890 = vunpack.c.l.b16 %v835
        %v891 = vunpack.c.l.b16 %v836
        %v892 = vunpack.c.l.b16 %v837
        %v893 = vunpack.c.l.b16 %v838
        %v894 = vunpack.c.l.b16 %v839
        %v895 = vunpack.c.l.b16 %v840
        %v896 = vunpack.c.l.b16 %v841
        %v897 = vunpack.c.l.b16 %v842
        %v898 = vpack.c.b16 %v883, %v882
        %v899 = vpack.c.b16 %v885, %v884
        %v900 = vpack.c.b16 %v887, %v886
        %v901 = vpack.c.b16 %v889, %v888
        %v902 = vpack.c.b16 %v891, %v890
        %v903 = vpack.c.b16 %v893, %v892
        %v904 = vpack.c.b16 %v895, %v894
        %v905 = vpack.c.b16 %v897, %v896
        %v930 = vunpack.c.l.b16 %v843
        %v931 = vunpack.c.l.b16 %v844
        %v932 = vunpack.c.l.b16 %v845
        %v933 = vunpack.c.l.b16 %v846
        %v934 = vunpack.c.l.b16 %v847
        %v935 = vunpack.c.l.b16 %v848
        %v936 = vunpack.c.l.b16 %v849
        %v937 = vunpack.c.l.b16 %v850
        %v938 = vunpack.c.l.b16 %v851
        %v939 = vunpack.c.l.b16 %v852
        %v940 = vunpack.c.l.b16 %v853
        %v941 = vunpack.c.l.b16 %v854
        %v942 = vunpack.c.l.b16 %v855
        %v943 = vunpack.c.l.b16 %v856
        %v944 = vunpack.c.l.b16 %v857
        %v945 = vunpack.c.l.b16 %v858
        %v946 = vpack.c.b16 %v931, %v930
        %v947 = vpack.c.b16 %v933, %v932
        %v948 = vpack.c.b16 %v935, %v934
        %v949 = vpack.c.b16 %v937, %v936
        %v950 = vpack.c.b16 %v939, %v938
        %v951 = vpack.c.b16 %v941, %v940
        %v952 = vpack.c.b16 %v943, %v942
        %v953 = vpack.c.b16 %v945, %v944
        %962 = vmatprep.subr.bf16.mxu0 0
        %963 = vmatpush1.bf16.msra.mxu0 %v946
        %964 = vmatprep.subr.bf16.mxu0 0
        %965 = vmatpush1.bf16.msra.mxu0 %v947
        %966 = vmatprep.subr.bf16.mxu0 0
        %967 = vmatpush1.bf16.msra.mxu0 %v948
        %968 = vmatprep.subr.bf16.mxu0 0
        %969 = vmatpush1.bf16.msra.mxu0 %v949
        %970 = vmatprep.subr.bf16.mxu0 0
        %971 = vmatpush1.bf16.msra.mxu0 %v950
        %972 = vmatprep.subr.bf16.mxu0 0
        %973 = vmatpush1.bf16.msra.mxu0 %v951
        %974 = vmatprep.subr.bf16.mxu0 0
        %975 = vmatpush1.bf16.msra.mxu0 %v952
        %976 = vmatprep.subr.bf16.mxu0 0
        %977 = vmatpush1.bf16.msra.mxu0 %v953
        %978 = vmatprep.subr.bf16.mxu0 0
        %979 = vmatpush1.bf16.msra.mxu0 0
        %980 = vmatprep.subr.bf16.mxu0 0
        %981 = vmatpush1.bf16.msra.mxu0 0
        %982 = vmatprep.subr.bf16.mxu0 0
        %983 = vmatpush1.bf16.msra.mxu0 0
        %984 = vmatprep.subr.bf16.mxu0 0
        %985 = vmatpush1.bf16.msra.mxu0 0
        %986 = vmatprep.subr.bf16.mxu0 0
        %987 = vmatpush1.bf16.msra.mxu0 0
        %988 = vmatprep.subr.bf16.mxu0 0
        %989 = vmatpush1.bf16.msra.mxu0 0
        %990 = vmatprep.subr.bf16.mxu0 0
        %991 = vmatpush1.bf16.msra.mxu0 0
        %992 = vmatprep.subr.bf16.mxu0 0
        %993 = vmatpush1.bf16.msra.mxu0 0
        %994 = vmatprep.mubr.bf16.mxu0 0
        %995 = vmatmul.mubr.bf16.gmra.mrb[0].mxu0 %v898
        %v996 = vpop.f32.mrb[0].mxu0
        %v997 = vadd.f32 %v864, %v996
        %v998 = vpop.f32.mrb[0].mxu0
        %v999 = vpop.f32.mrb[0].mxu0
        %v1000 = vadd.f32 %v864, %v999
        %v1001 = vpop.f32.mrb[0].mxu0
        %1002 = vmatprep.mubr.bf16.mxu0 0
        %1003 = vmatmul.mubr.bf16.gmra.mrb[0].mxu0 %v899
        %v1004 = vpop.f32.mrb[0].mxu0
        %v1005 = vadd.f32 %v864, %v1004
        %v1006 = vpop.f32.mrb[0].mxu0
        %v1007 = vpop.f32.mrb[0].mxu0
        %v1008 = vadd.f32 %v864, %v1007
        %v1009 = vpop.f32.mrb[0].mxu0
        %1010 = vmatprep.mubr.bf16.mxu0 0
        %1011 = vmatmul.mubr.bf16.gmra.mrb[0].mxu0 %v900
        %v1012 = vpop.f32.mrb[0].mxu0
        %v1013 = vadd.f32 %v864, %v1012
        %v1014 = vpop.f32.mrb[0].mxu0
        %v1015 = vpop.f32.mrb[0].mxu0
        %v1016 = vadd.f32 %v864, %v1015
        %v1017 = vpop.f32.mrb[0].mxu0
        %1018 = vmatprep.mubr.bf16.mxu0 0
        %1019 = vmatmul.mubr.bf16.gmra.mrb[0].mxu0 %v901
        %v1020 = vpop.f32.mrb[0].mxu0
        %v1021 = vadd.f32 %v864, %v1020
        %v1022 = vpop.f32.mrb[0].mxu0
        %v1023 = vpop.f32.mrb[0].mxu0
        %v1024 = vadd.f32 %v864, %v1023
        %v1025 = vpop.f32.mrb[0].mxu0
        %1026 = vmatprep.mubr.bf16.mxu0 0
        %1027 = vmatmul.mubr.bf16.gmra.mrb[0].mxu0 %v902
        %v1028 = vpop.f32.mrb[0].mxu0
        %v1029 = vadd.f32 %v864, %v1028
        %v1030 = vpop.f32.mrb[0].mxu0
        %v1031 = vpop.f32.mrb[0].mxu0
        %v1032 = vadd.f32 %v864, %v1031
        %v1033 = vpop.f32.mrb[0].mxu0
        %1034 = vmatprep.mubr.bf16.mxu0 0
        %1035 = vmatmul.mubr.bf16.gmra.mrb[0].mxu0 %v903
        %v1036 = vpop.f32.mrb[0].mxu0
        %v1037 = vadd.f32 %v864, %v1036
        %v1038 = vpop.f32.mrb[0].mxu0
        %v1039 = vpop.f32.mrb[0].mxu0
        %v1040 = vadd.f32 %v864, %v1039
        %v1041 = vpop.f32.mrb[0].mxu0
        %1042 = vmatprep.mubr.bf16.mxu0 0
        %1043 = vmatmul.mubr.bf16.gmra.mrb[0].mxu0 %v904
        %v1044 = vpop.f32.mrb[0].mxu0
        %v1045 = vadd.f32 %v864, %v1044
        %v1046 = vpop.f32.mrb[0].mxu0
        %v1047 = vpop.f32.mrb[0].mxu0
        %v1048 = vadd.f32 %v864, %v1047
        %v1049 = vpop.f32.mrb[0].mxu0
        %1050 = vmatprep.mubr.bf16.mxu0 0
        %1051 = vmatmul.mubr.bf16.gmra.mrb[0].mxu0 %v905
        %v1052 = vpop.f32.mrb[0].mxu0
        %v1053 = vadd.f32 %v864, %v1052
        %v1054 = vpop.f32.mrb[0].mxu0
        %v1055 = vpop.f32.mrb[0].mxu0
        %v1056 = vadd.f32 %v864, %v1055
        %v1057 = vpop.f32.mrb[0].mxu0
        %1058 = vdwg.mxu0
        %v1059 = vpack.c.bf16 %v1000, %v997
        %v1060 = vpack.c.bf16 %v1008, %v1005
        %v1061 = vpack.c.bf16 %v1016, %v1013
        %v1062 = vpack.c.bf16 %v1024, %v1021
        %v1063 = vpack.c.bf16 %v1032, %v1029
        %v1064 = vpack.c.bf16 %v1040, %v1037
        %v1065 = vpack.c.bf16 %v1048, %v1045
        %v1066 = vpack.c.bf16 %v1056, %v1053
        %v1067 = vld [vmem:[%s448] sm:$0xf]
        %v1068 = vld [vmem:[%s448 + $0x4] sm:$0xf]
        %v1069 = vld [vmem:[%s448 + $0x8] sm:$0xf]
        %v1070 = vld [vmem:[%s448 + $0xc] sm:$0xf]
        %v1071 = vld [vmem:[%s448 + $0x10] sm:$0xf]
        %v1072 = vld [vmem:[%s448 + $0x14] sm:$0xf]
        %v1073 = vld [vmem:[%s448 + $0x18] sm:$0xf]
        %v1074 = vld [vmem:[%s448 + $0x1c] sm:$0xf]
        %v1075 = vld [vmem:[%s448 + $0x20] sm:$0xf]
        %v1076 = vld [vmem:[%s448 + $0x24] sm:$0xf]
        %v1077 = vld [vmem:[%s448 + $0x28] sm:$0xf]
        %v1078 = vld [vmem:[%s448 + $0x2c] sm:$0xf]
        %v1079 = vld [vmem:[%s448 + $0x30] sm:$0xf]
        %v1080 = vld [vmem:[%s448 + $0x34] sm:$0xf]
        %v1081 = vld [vmem:[%s448 + $0x38] sm:$0xf]
        %v1082 = vld [vmem:[%s448 + $0x3c] sm:$0xf]
        %v1083 = vld [vmem:[#allocation15] sm:$0xf]
        %v1084 = vld [vmem:[#allocation15 + $0x4] sm:$0xf]
        %v1085 = vld [vmem:[#allocation15 + $0x8] sm:$0xf]
        %v1086 = vld [vmem:[#allocation15 + $0xc] sm:$0xf]
        %v1087 = vld [vmem:[#allocation15 + $0x10] sm:$0xf]
        %v1088 = vld [vmem:[#allocation15 + $0x14] sm:$0xf]
        %v1089 = vld [vmem:[#allocation15 + $0x18] sm:$0xf]
        %v1090 = vld [vmem:[#allocation15 + $0x1c] sm:$0xf]
        %v1091 = vld [vmem:[#allocation15 + $0x20] sm:$0xf]
        %v1092 = vld [vmem:[#allocation15 + $0x24] sm:$0xf]
        %v1093 = vld [vmem:[#allocation15 + $0x28] sm:$0xf]
        %v1094 = vld [vmem:[#allocation15 + $0x2c] sm:$0xf]
        %v1095 = vld [vmem:[#allocation15 + $0x30] sm:$0xf]
        %v1096 = vld [vmem:[#allocation15 + $0x34] sm:$0xf]
        %v1097 = vld [vmem:[#allocation15 + $0x38] sm:$0xf]
        %v1098 = vld [vmem:[#allocation15 + $0x3c] sm:$0xf]
        %v1099 = vld [vmem:[%s8] sm:$0x1]
        %v1101 = vlaneseq
        %v1102 = vshrl.u32 %v1101, 7
        %v1103 = vsub.s32 0, %v1102
        %v1104 = vrot.slane %v1099, %v1103
        %v1122 = vunpack.c.l.b16 %v1067
        %v1123 = vunpack.c.l.b16 %v1068
        %v1124 = vunpack.c.l.b16 %v1069
        %v1125 = vunpack.c.l.b16 %v1070
        %v1126 = vunpack.c.l.b16 %v1071
        %v1127 = vunpack.c.l.b16 %v1072
        %v1128 = vunpack.c.l.b16 %v1073
        %v1129 = vunpack.c.l.b16 %v1074
        %v1130 = vunpack.c.l.b16 %v1075
        %v1131 = vunpack.c.l.b16 %v1076
        %v1132 = vunpack.c.l.b16 %v1077
        %v1133 = vunpack.c.l.b16 %v1078
        %v1134 = vunpack.c.l.b16 %v1079
        %v1135 = vunpack.c.l.b16 %v1080
        %v1136 = vunpack.c.l.b16 %v1081
        %v1137 = vunpack.c.l.b16 %v1082
        %v1138 = vpack.c.b16 %v1123, %v1122
        %v1139 = vpack.c.b16 %v1125, %v1124
        %v1140 = vpack.c.b16 %v1127, %v1126
        %v1141 = vpack.c.b16 %v1129, %v1128
        %v1142 = vpack.c.b16 %v1131, %v1130
        %v1143 = vpack.c.b16 %v1133, %v1132
        %v1144 = vpack.c.b16 %v1135, %v1134
        %v1145 = vpack.c.b16 %v1137, %v1136
        %v1170 = vunpack.c.l.b16 %v1083
        %v1171 = vunpack.c.l.b16 %v1084
        %v1172 = vunpack.c.l.b16 %v1085
        %v1173 = vunpack.c.l.b16 %v1086
        %v1174 = vunpack.c.l.b16 %v1087
        %v1175 = vunpack.c.l.b16 %v1088
        %v1176 = vunpack.c.l.b16 %v1089
        %v1177 = vunpack.c.l.b16 %v1090
        %v1178 = vunpack.c.l.b16 %v1091
        %v1179 = vunpack.c.l.b16 %v1092
        %v1180 = vunpack.c.l.b16 %v1093
        %v1181 = vunpack.c.l.b16 %v1094
        %v1182 = vunpack.c.l.b16 %v1095
        %v1183 = vunpack.c.l.b16 %v1096
        %v1184 = vunpack.c.l.b16 %v1097
        %v1185 = vunpack.c.l.b16 %v1098
        %v1186 = vpack.c.b16 %v1171, %v1170
        %v1187 = vpack.c.b16 %v1173, %v1172
        %v1188 = vpack.c.b16 %v1175, %v1174
        %v1189 = vpack.c.b16 %v1177, %v1176
        %v1190 = vpack.c.b16 %v1179, %v1178
        %v1191 = vpack.c.b16 %v1181, %v1180
        %v1192 = vpack.c.b16 %v1183, %v1182
        %v1193 = vpack.c.b16 %v1185, %v1184
        %1202 = vmatprep.subr.bf16.mxu0 0
        %1203 = vmatpush1.bf16.msra.mxu0 %v1186
        %1204 = vmatprep.subr.bf16.mxu0 0
        %1205 = vmatpush1.bf16.msra.mxu0 %v1187
        %1206 = vmatprep.subr.bf16.mxu0 0
        %1207 = vmatpush1.bf16.msra.mxu0 %v1188
        %1208 = vmatprep.subr.bf16.mxu0 0
        %1209 = vmatpush1.bf16.msra.mxu0 %v1189
        %1210 = vmatprep.subr.bf16.mxu0 0
        %1211 = vmatpush1.bf16.msra.mxu0 %v1190
        %1212 = vmatprep.subr.bf16.mxu0 0
        %1213 = vmatpush1.bf16.msra.mxu0 %v1191
        %1214 = vmatprep.subr.bf16.mxu0 0
        %1215 = vmatpush1.bf16.msra.mxu0 %v1192
        %1216 = vmatprep.subr.bf16.mxu0 0
        %1217 = vmatpush1.bf16.msra.mxu0 %v1193
        %1218 = vmatprep.subr.bf16.mxu0 0
        %1219 = vmatpush1.bf16.msra.mxu0 0
        %1220 = vmatprep.subr.bf16.mxu0 0
        %1221 = vmatpush1.bf16.msra.mxu0 0
        %1222 = vmatprep.subr.bf16.mxu0 0
        %1223 = vmatpush1.bf16.msra.mxu0 0
        %1224 = vmatprep.subr.bf16.mxu0 0
        %1225 = vmatpush1.bf16.msra.mxu0 0
        %1226 = vmatprep.subr.bf16.mxu0 0
        %1227 = vmatpush1.bf16.msra.mxu0 0
        %1228 = vmatprep.subr.bf16.mxu0 0
        %1229 = vmatpush1.bf16.msra.mxu0 0
        %1230 = vmatprep.subr.bf16.mxu0 0
        %1231 = vmatpush1.bf16.msra.mxu0 0
        %1232 = vmatprep.subr.bf16.mxu0 0
        %1233 = vmatpush1.bf16.msra.mxu0 0
        %1234 = vmatprep.mubr.bf16.mxu0 0
        %1235 = vmatmul.mubr.bf16.gmra.mrb[0].mxu0 %v1138
        %v1236 = vpop.f32.mrb[0].mxu0
        %v1237 = vadd.f32 %v1104, %v1236
        %v1238 = vpop.f32.mrb[0].mxu0
        %v1239 = vpop.f32.mrb[0].mxu0
        %v1240 = vadd.f32 %v1104, %v1239
        %v1241 = vpop.f32.mrb[0].mxu0
        %1242 = vmatprep.mubr.bf16.mxu0 0
        %1243 = vmatmul.mubr.bf16.gmra.mrb[0].mxu0 %v1139
        %v1244 = vpop.f32.mrb[0].mxu0
        %v1245 = vadd.f32 %v1104, %v1244
        %v1246 = vpop.f32.mrb[0].mxu0
        %v1247 = vpop.f32.mrb[0].mxu0
        %v1248 = vadd.f32 %v1104, %v1247
        %v1249 = vpop.f32.mrb[0].mxu0
        %1250 = vmatprep.mubr.bf16.mxu0 0
        %1251 = vmatmul.mubr.bf16.gmra.mrb[0].mxu0 %v1140
        %v1252 = vpop.f32.mrb[0].mxu0
        %v1253 = vadd.f32 %v1104, %v1252
        %v1254 = vpop.f32.mrb[0].mxu0
        %v1255 = vpop.f32.mrb[0].mxu0
        %v1256 = vadd.f32 %v1104, %v1255
        %v1257 = vpop.f32.mrb[0].mxu0
        %1258 = vmatprep.mubr.bf16.mxu0 0
        %1259 = vmatmul.mubr.bf16.gmra.mrb[0].mxu0 %v1141
        %v1260 = vpop.f32.mrb[0].mxu0
        %v1261 = vadd.f32 %v1104, %v1260
        %v1262 = vpop.f32.mrb[0].mxu0
        %v1263 = vpop.f32.mrb[0].mxu0
        %v1264 = vadd.f32 %v1104, %v1263
        %v1265 = vpop.f32.mrb[0].mxu0
        %1266 = vmatprep.mubr.bf16.mxu0 0
        %1267 = vmatmul.mubr.bf16.gmra.mrb[0].mxu0 %v1142
        %v1268 = vpop.f32.mrb[0].mxu0
        %v1269 = vadd.f32 %v1104, %v1268
        %v1270 = vpop.f32.mrb[0].mxu0
        %v1271 = vpop.f32.mrb[0].mxu0
        %v1272 = vadd.f32 %v1104, %v1271
        %v1273 = vpop.f32.mrb[0].mxu0
        %1274 = vmatprep.mubr.bf16.mxu0 0
        %1275 = vmatmul.mubr.bf16.gmra.mrb[0].mxu0 %v1143
        %v1276 = vpop.f32.mrb[0].mxu0
        %v1277 = vadd.f32 %v1104, %v1276
        %v1278 = vpop.f32.mrb[0].mxu0
        %v1279 = vpop.f32.mrb[0].mxu0
        %v1280 = vadd.f32 %v1104, %v1279
        %v1281 = vpop.f32.mrb[0].mxu0
        %1282 = vmatprep.mubr.bf16.mxu0 0
        %1283 = vmatmul.mubr.bf16.gmra.mrb[0].mxu0 %v1144
        %v1284 = vpop.f32.mrb[0].mxu0
        %v1285 = vadd.f32 %v1104, %v1284
        %v1286 = vpop.f32.mrb[0].mxu0
        %v1287 = vpop.f32.mrb[0].mxu0
        %v1288 = vadd.f32 %v1104, %v1287
        %v1289 = vpop.f32.mrb[0].mxu0
        %1290 = vmatprep.mubr.bf16.mxu0 0
        %1291 = vmatmul.mubr.bf16.gmra.mrb[0].mxu0 %v1145
        %v1292 = vpop.f32.mrb[0].mxu0
        %v1293 = vadd.f32 %v1104, %v1292
        %v1294 = vpop.f32.mrb[0].mxu0
        %v1295 = vpop.f32.mrb[0].mxu0
        %v1296 = vadd.f32 %v1104, %v1295
        %v1297 = vpop.f32.mrb[0].mxu0
        %1298 = vdwg.mxu0
        %v1299 = vpack.c.bf16 %v1240, %v1237
        %v1300 = vpack.c.bf16 %v1248, %v1245
        %v1301 = vpack.c.bf16 %v1256, %v1253
        %v1302 = vpack.c.bf16 %v1264, %v1261
        %v1303 = vpack.c.bf16 %v1272, %v1269
        %v1304 = vpack.c.bf16 %v1280, %v1277
        %v1305 = vpack.c.bf16 %v1288, %v1285
        %v1306 = vpack.c.bf16 %v1296, %v1293
        %v1307 = vld [vmem:[#allocation2] sm:$0xff]
        %v1308 = vld [vmem:[#allocation2 + $0x8] sm:$0xff]
        %v1309 = vld [vmem:[#allocation2 + $0x10] sm:$0xff]
        %v1310 = vld [vmem:[#allocation2 + $0x18] sm:$0xff]
        %v1311 = vld [vmem:[#allocation2 + $0x20] sm:$0xff]
        %v1312 = vld [vmem:[#allocation2 + $0x28] sm:$0xff]
        %v1313 = vld [vmem:[#allocation2 + $0x30] sm:$0xff]
        %v1314 = vld [vmem:[#allocation2 + $0x38] sm:$0xff]
        %1315 = vmatprep.subr.bf16.mxu0 0
        %1316 = vmatpush1.bf16.xpose.msra.mxu0 %v1059
        %1317 = vmatprep.subr.bf16.mxu0 0
        %1318 = vmatpush1.bf16.xpose.msra.mxu0 %v1060
        %1319 = vmatprep.subr.bf16.mxu0 0
        %1320 = vmatpush1.bf16.xpose.msra.mxu0 %v1061
        %1321 = vmatprep.subr.bf16.mxu0 0
        %1322 = vmatpush1.bf16.xpose.msra.mxu0 %v1062
        %1323 = vmatprep.subr.bf16.mxu0 0
        %1324 = vmatpush1.bf16.xpose.msra.mxu0 %v1063
        %1325 = vmatprep.subr.bf16.mxu0 0
        %1326 = vmatpush1.bf16.xpose.msra.mxu0 %v1064
        %1327 = vmatprep.subr.bf16.mxu0 0
        %1328 = vmatpush1.bf16.xpose.msra.mxu0 %v1065
        %1329 = vmatprep.subr.bf16.mxu0 0
        %1330 = vmatpush1.bf16.xpose.msra.mxu0 %v1066
        %1331 = vmatprep.subr.bf16.mxu0 0
        %1332 = vmatpush1.bf16.xpose.msra.mxu0 0
        %1333 = vmatprep.subr.bf16.mxu0 0
        %1334 = vmatpush1.bf16.xpose.msra.mxu0 0
        %1335 = vmatprep.subr.bf16.mxu0 0
        %1336 = vmatpush1.bf16.xpose.msra.mxu0 0
        %1337 = vmatprep.subr.bf16.mxu0 0
        %1338 = vmatpush1.bf16.xpose.msra.mxu0 0
        %1339 = vmatprep.subr.bf16.mxu0 0
        %1340 = vmatpush1.bf16.xpose.msra.mxu0 0
        %1341 = vmatprep.subr.bf16.mxu0 0
        %1342 = vmatpush1.bf16.xpose.msra.mxu0 0
        %1343 = vmatprep.subr.bf16.mxu0 0
        %1344 = vmatpush1.bf16.xpose.msra.mxu0 0
        %1345 = vmatprep.subr.bf16.mxu0 0
        %1346 = vmatpush1.bf16.xpose.msra.mxu0 0
        %1347 = vmatprep.mubr.bf16.mxu0 0
        %1348 = vmatmul.mubr.bf16.gmra.mrb[0].mxu0 %v1307
        %v1349 = vpop.f32.mrb[0].mxu0
        %v1350 = vadd.f32 0.0, %v1349
        %v1351 = vpop.f32.mrb[0].mxu0
        %v1352 = vpop.f32.mrb[0].mxu0
        %v1353 = vadd.f32 0.0, %v1352
        %v1354 = vpop.f32.mrb[0].mxu0
        %1355 = vmatprep.mubr.bf16.mxu0 0
        %1356 = vmatmul.mubr.bf16.gmra.mrb[0].mxu0 %v1308
        %v1357 = vpop.f32.mrb[0].mxu0
        %v1358 = vadd.f32 0.0, %v1357
        %v1359 = vpop.f32.mrb[0].mxu0
        %v1360 = vpop.f32.mrb[0].mxu0
        %v1361 = vadd.f32 0.0, %v1360
        %v1362 = vpop.f32.mrb[0].mxu0
        %1363 = vmatprep.mubr.bf16.mxu0 0
        %1364 = vmatmul.mubr.bf16.gmra.mrb[0].mxu0 %v1309
        %v1365 = vpop.f32.mrb[0].mxu0
        %v1366 = vadd.f32 0.0, %v1365
        %v1367 = vpop.f32.mrb[0].mxu0
        %v1368 = vpop.f32.mrb[0].mxu0
        %v1369 = vadd.f32 0.0, %v1368
        %v1370 = vpop.f32.mrb[0].mxu0
        %1371 = vmatprep.mubr.bf16.mxu0 0
        %1372 = vmatmul.mubr.bf16.gmra.mrb[0].mxu0 %v1310
        %v1373 = vpop.f32.mrb[0].mxu0
        %v1374 = vadd.f32 0.0, %v1373
        %v1375 = vpop.f32.mrb[0].mxu0
        %v1376 = vpop.f32.mrb[0].mxu0
        %v1377 = vadd.f32 0.0, %v1376
        %v1378 = vpop.f32.mrb[0].mxu0
        %1379 = vmatprep.mubr.bf16.mxu0 0
        %1380 = vmatmul.mubr.bf16.gmra.mrb[0].mxu0 %v1311
        %v1381 = vpop.f32.mrb[0].mxu0
        %v1382 = vadd.f32 0.0, %v1381
        %v1383 = vpop.f32.mrb[0].mxu0
        %v1384 = vpop.f32.mrb[0].mxu0
        %v1385 = vadd.f32 0.0, %v1384
        %v1386 = vpop.f32.mrb[0].mxu0
        %1387 = vmatprep.mubr.bf16.mxu0 0
        %1388 = vmatmul.mubr.bf16.gmra.mrb[0].mxu0 %v1312
        %v1389 = vpop.f32.mrb[0].mxu0
        %v1390 = vadd.f32 0.0, %v1389
        %v1391 = vpop.f32.mrb[0].mxu0
        %v1392 = vpop.f32.mrb[0].mxu0
        %v1393 = vadd.f32 0.0, %v1392
        %v1394 = vpop.f32.mrb[0].mxu0
        %1395 = vmatprep.mubr.bf16.mxu0 0
        %1396 = vmatmul.mubr.bf16.gmra.mrb[0].mxu0 %v1313
        %v1397 = vpop.f32.mrb[0].mxu0
        %v1398 = vadd.f32 0.0, %v1397
        %v1399 = vpop.f32.mrb[0].mxu0
        %v1400 = vpop.f32.mrb[0].mxu0
        %v1401 = vadd.f32 0.0, %v1400
        %v1402 = vpop.f32.mrb[0].mxu0
        %1403 = vmatprep.mubr.bf16.mxu0 0
        %1404 = vmatmul.mubr.bf16.gmra.mrb[0].mxu0 %v1314
        %v1405 = vpop.f32.mrb[0].mxu0
        %v1406 = vadd.f32 0.0, %v1405
        %v1407 = vpop.f32.mrb[0].mxu0
        %v1408 = vpop.f32.mrb[0].mxu0
        %v1409 = vadd.f32 0.0, %v1408
        %v1410 = vpop.f32.mrb[0].mxu0
        %1411 = vdwg.mxu0
        %v1412 = vld [vmem:[#allocation3] sm:$0xff]
        %v1413 = vld [vmem:[#allocation3 + $0x8] sm:$0xff]
        %v1414 = vld [vmem:[#allocation3 + $0x10] sm:$0xff]
        %v1415 = vld [vmem:[#allocation3 + $0x18] sm:$0xff]
        %v1416 = vld [vmem:[#allocation3 + $0x20] sm:$0xff]
        %v1417 = vld [vmem:[#allocation3 + $0x28] sm:$0xff]
        %v1418 = vld [vmem:[#allocation3 + $0x30] sm:$0xff]
        %v1419 = vld [vmem:[#allocation3 + $0x38] sm:$0xff]
        %v1420 = vld [vmem:[#allocation3 + $0x40] sm:$0xff]
        %v1421 = vld [vmem:[#allocation3 + $0x48] sm:$0xff]
        %v1422 = vld [vmem:[#allocation3 + $0x50] sm:$0xff]
        %v1423 = vld [vmem:[#allocation3 + $0x58] sm:$0xff]
        %v1424 = vld [vmem:[#allocation3 + $0x60] sm:$0xff]
        %v1425 = vld [vmem:[#allocation3 + $0x68] sm:$0xff]
        %v1426 = vld [vmem:[#allocation3 + $0x70] sm:$0xff]
        %v1427 = vld [vmem:[#allocation3 + $0x78] sm:$0xff]
        %1428 = vmax.xlane.f32.xlu0 %v1350
        %v1429 = vpop.xlane.xlu0 %1428
        %1430 = vmax.xlane.f32.xlu0 %v1353
        %v1431 = vpop.xlane.xlu0 %1430
        %1432 = vmax.xlane.f32.xlu0 %v1358
        %v1433 = vpop.xlane.xlu0 %1432
        %1434 = vmax.xlane.f32.xlu0 %v1361
        %v1435 = vpop.xlane.xlu0 %1434
        %1436 = vmax.xlane.f32.xlu0 %v1366
        %v1437 = vpop.xlane.xlu0 %1436
        %1438 = vmax.xlane.f32.xlu0 %v1369
        %v1439 = vpop.xlane.xlu0 %1438
        %1440 = vmax.xlane.f32.xlu0 %v1374
        %v1441 = vpop.xlane.xlu0 %1440
        %1442 = vmax.xlane.f32.xlu0 %v1377
        %v1443 = vpop.xlane.xlu0 %1442
        %1444 = vmax.xlane.f32.xlu0 %v1382
        %v1445 = vpop.xlane.xlu0 %1444
        %1446 = vmax.xlane.f32.xlu0 %v1385
        %v1447 = vpop.xlane.xlu0 %1446
        %1448 = vmax.xlane.f32.xlu0 %v1390
        %v1449 = vpop.xlane.xlu0 %1448
        %1450 = vmax.xlane.f32.xlu0 %v1393
        %v1451 = vpop.xlane.xlu0 %1450
        %1452 = vmax.xlane.f32.xlu0 %v1398
        %v1453 = vpop.xlane.xlu0 %1452
        %1454 = vmax.xlane.f32.xlu0 %v1401
        %v1455 = vpop.xlane.xlu0 %1454
        %1456 = vmax.xlane.f32.xlu0 %v1406
        %v1457 = vpop.xlane.xlu0 %1456
        %1458 = vmax.xlane.f32.xlu0 %v1409
        %v1459 = vpop.xlane.xlu0 %1458
        %v1460 = vmax.f32 %v1412, %v1429
        %v1461 = vmax.f32 %v1413, %v1431
        %v1462 = vmax.f32 %v1414, %v1433
        %v1463 = vmax.f32 %v1415, %v1435
        %v1464 = vmax.f32 %v1416, %v1437
        %v1465 = vmax.f32 %v1417, %v1439
        %v1466 = vmax.f32 %v1418, %v1441
        %v1467 = vmax.f32 %v1419, %v1443
        %v1468 = vmax.f32 %v1420, %v1445
        %v1469 = vmax.f32 %v1421, %v1447
        %v1470 = vmax.f32 %v1422, %v1449
        %v1471 = vmax.f32 %v1423, %v1451
        %v1472 = vmax.f32 %v1424, %v1453
        %v1473 = vmax.f32 %v1425, %v1455
        %v1474 = vmax.f32 %v1426, %v1457
        %v1475 = vmax.f32 %v1427, %v1459
        %v1476 = vsub.f32 %v1412, %v1460
        %v1477 = vsub.f32 %v1413, %v1461
        %v1478 = vsub.f32 %v1414, %v1462
        %v1479 = vsub.f32 %v1415, %v1463
        %v1480 = vsub.f32 %v1416, %v1464
        %v1481 = vsub.f32 %v1417, %v1465
        %v1482 = vsub.f32 %v1418, %v1466
        %v1483 = vsub.f32 %v1419, %v1467
        %v1484 = vsub.f32 %v1420, %v1468
        %v1485 = vsub.f32 %v1421, %v1469
        %v1486 = vsub.f32 %v1422, %v1470
        %v1487 = vsub.f32 %v1423, %v1471
        %v1488 = vsub.f32 %v1424, %v1472
        %v1489 = vsub.f32 %v1425, %v1473
        %v1490 = vsub.f32 %v1426, %v1474
        %v1491 = vsub.f32 %v1427, %v1475
        %v1492 = vmul.f32 %v1476, 1.442695
        %v1493 = vpow.pop %v1492
        %v1494 = vmul.f32 %v1477, 1.442695
        %v1495 = vpow.pop %v1494
        %v1496 = vmul.f32 %v1478, 1.442695
        %v1497 = vpow.pop %v1496
        %v1498 = vmul.f32 %v1479, 1.442695
        %v1499 = vpow.pop %v1498
        %v1500 = vmul.f32 %v1480, 1.442695
        %v1501 = vpow.pop %v1500
        %v1502 = vmul.f32 %v1481, 1.442695
        %v1503 = vpow.pop %v1502
        %v1504 = vmul.f32 %v1482, 1.442695
        %v1505 = vpow.pop %v1504
        %v1506 = vmul.f32 %v1483, 1.442695
        %v1507 = vpow.pop %v1506
        %v1508 = vmul.f32 %v1484, 1.442695
        %v1509 = vpow.pop %v1508
        %v1510 = vmul.f32 %v1485, 1.442695
        %v1511 = vpow.pop %v1510
        %v1512 = vmul.f32 %v1486, 1.442695
        %v1513 = vpow.pop %v1512
        %v1514 = vmul.f32 %v1487, 1.442695
        %v1515 = vpow.pop %v1514
        %v1516 = vmul.f32 %v1488, 1.442695
        %v1517 = vpow.pop %v1516
        %v1518 = vmul.f32 %v1489, 1.442695
        %v1519 = vpow.pop %v1518
        %v1520 = vmul.f32 %v1490, 1.442695
        %v1521 = vpow.pop %v1520
        %v1522 = vmul.f32 %v1491, 1.442695
        %v1523 = vpow.pop %v1522
        %1525 = vset.pattern.permute.xlu0 0
        %1526 = vperm.xlu0 %1525, %v1460
        %v1527 = vpop.permute.xlu0 %1526
        %1530 = vset.pattern.permute.xlu0 0
        %1531 = vperm.xlu0 %1530, %v1461
        %v1532 = vpop.permute.xlu0 %1531
        %1535 = vset.pattern.permute.xlu0 0
        %1536 = vperm.xlu0 %1535, %v1462
        %v1537 = vpop.permute.xlu0 %1536
        %1540 = vset.pattern.permute.xlu0 0
        %1541 = vperm.xlu0 %1540, %v1463
        %v1542 = vpop.permute.xlu0 %1541
        %1545 = vset.pattern.permute.xlu0 0
        %1546 = vperm.xlu0 %1545, %v1464
        %v1547 = vpop.permute.xlu0 %1546
        %1550 = vset.pattern.permute.xlu0 0
        %1551 = vperm.xlu0 %1550, %v1465
        %v1552 = vpop.permute.xlu0 %1551
        %1555 = vset.pattern.permute.xlu0 0
        %1556 = vperm.xlu0 %1555, %v1466
        %v1557 = vpop.permute.xlu0 %1556
        %1560 = vset.pattern.permute.xlu0 0
        %1561 = vperm.xlu0 %1560, %v1467
        %v1562 = vpop.permute.xlu0 %1561
        %1565 = vset.pattern.permute.xlu0 0
        %1566 = vperm.xlu0 %1565, %v1468
        %v1567 = vpop.permute.xlu0 %1566
        %1570 = vset.pattern.permute.xlu0 0
        %1571 = vperm.xlu0 %1570, %v1469
        %v1572 = vpop.permute.xlu0 %1571
        %1575 = vset.pattern.permute.xlu0 0
        %1576 = vperm.xlu0 %1575, %v1470
        %v1577 = vpop.permute.xlu0 %1576
        %1580 = vset.pattern.permute.xlu0 0
        %1581 = vperm.xlu0 %1580, %v1471
        %v1582 = vpop.permute.xlu0 %1581
        %1585 = vset.pattern.permute.xlu0 0
        %1586 = vperm.xlu0 %1585, %v1472
        %v1587 = vpop.permute.xlu0 %1586
        %1590 = vset.pattern.permute.xlu0 0
        %1591 = vperm.xlu0 %1590, %v1473
        %v1592 = vpop.permute.xlu0 %1591
        %1595 = vset.pattern.permute.xlu0 0
        %1596 = vperm.xlu0 %1595, %v1474
        %v1597 = vpop.permute.xlu0 %1596
        %1600 = vset.pattern.permute.xlu0 0
        %1601 = vperm.xlu0 %1600, %v1475
        %v1602 = vpop.permute.xlu0 %1601
        %v1604 = vsub.f32 %v1350, %v1527
        %v1605 = vsub.f32 %v1353, %v1532
        %v1606 = vsub.f32 %v1358, %v1537
        %v1607 = vsub.f32 %v1361, %v1542
        %v1608 = vsub.f32 %v1366, %v1547
        %v1609 = vsub.f32 %v1369, %v1552
        %v1610 = vsub.f32 %v1374, %v1557
        %v1611 = vsub.f32 %v1377, %v1562
        %v1612 = vsub.f32 %v1382, %v1567
        %v1613 = vsub.f32 %v1385, %v1572
        %v1614 = vsub.f32 %v1390, %v1577
        %v1615 = vsub.f32 %v1393, %v1582
        %v1616 = vsub.f32 %v1398, %v1587
        %v1617 = vsub.f32 %v1401, %v1592
        %v1618 = vsub.f32 %v1406, %v1597
        %v1619 = vsub.f32 %v1409, %v1602
        %v1620 = vmul.f32 %v1604, 1.442695
        %v1621 = vpow.pop %v1620
        %v1622 = vmul.f32 %v1605, 1.442695
        %v1623 = vpow.pop %v1622
        %v1624 = vmul.f32 %v1606, 1.442695
        %v1625 = vpow.pop %v1624
        %v1626 = vmul.f32 %v1607, 1.442695
        %v1627 = vpow.pop %v1626
        %v1628 = vmul.f32 %v1608, 1.442695
        %v1629 = vpow.pop %v1628
        %v1630 = vmul.f32 %v1609, 1.442695
        %v1631 = vpow.pop %v1630
        %v1632 = vmul.f32 %v1610, 1.442695
        %v1633 = vpow.pop %v1632
        %v1634 = vmul.f32 %v1611, 1.442695
        %v1635 = vpow.pop %v1634
        %v1636 = vmul.f32 %v1612, 1.442695
        %v1637 = vpow.pop %v1636
        %v1638 = vmul.f32 %v1613, 1.442695
        %v1639 = vpow.pop %v1638
        %v1640 = vmul.f32 %v1614, 1.442695
        %v1641 = vpow.pop %v1640
        %v1642 = vmul.f32 %v1615, 1.442695
        %v1643 = vpow.pop %v1642
        %v1644 = vmul.f32 %v1616, 1.442695
        %v1645 = vpow.pop %v1644
        %v1646 = vmul.f32 %v1617, 1.442695
        %v1647 = vpow.pop %v1646
        %v1648 = vmul.f32 %v1618, 1.442695
        %v1649 = vpow.pop %v1648
        %v1650 = vmul.f32 %v1619, 1.442695
        %v1651 = vpow.pop %v1650
        %v1652 = vld [vmem:[#allocation4] sm:$0xff]
        %v1653 = vld [vmem:[#allocation4 + $0x8] sm:$0xff]
        %v1654 = vld [vmem:[#allocation4 + $0x10] sm:$0xff]
        %v1655 = vld [vmem:[#allocation4 + $0x18] sm:$0xff]
        %v1656 = vld [vmem:[#allocation4 + $0x20] sm:$0xff]
        %v1657 = vld [vmem:[#allocation4 + $0x28] sm:$0xff]
        %v1658 = vld [vmem:[#allocation4 + $0x30] sm:$0xff]
        %v1659 = vld [vmem:[#allocation4 + $0x38] sm:$0xff]
        %v1660 = vld [vmem:[#allocation4 + $0x40] sm:$0xff]
        %v1661 = vld [vmem:[#allocation4 + $0x48] sm:$0xff]
        %v1662 = vld [vmem:[#allocation4 + $0x50] sm:$0xff]
        %v1663 = vld [vmem:[#allocation4 + $0x58] sm:$0xff]
        %v1664 = vld [vmem:[#allocation4 + $0x60] sm:$0xff]
        %v1665 = vld [vmem:[#allocation4 + $0x68] sm:$0xff]
        %v1666 = vld [vmem:[#allocation4 + $0x70] sm:$0xff]
        %v1667 = vld [vmem:[#allocation4 + $0x78] sm:$0xff]
        %v1668 = vmul.f32 %v1493, %v1652
        %v1669 = vmul.f32 %v1495, %v1653
        %v1670 = vmul.f32 %v1497, %v1654
        %v1671 = vmul.f32 %v1499, %v1655
        %v1672 = vmul.f32 %v1501, %v1656
        %v1673 = vmul.f32 %v1503, %v1657
        %v1674 = vmul.f32 %v1505, %v1658
        %v1675 = vmul.f32 %v1507, %v1659
        %v1676 = vmul.f32 %v1509, %v1660
        %v1677 = vmul.f32 %v1511, %v1661
        %v1678 = vmul.f32 %v1513, %v1662
        %v1679 = vmul.f32 %v1515, %v1663
        %v1680 = vmul.f32 %v1517, %v1664
        %v1681 = vmul.f32 %v1519, %v1665
        %v1682 = vmul.f32 %v1521, %v1666
        %v1683 = vmul.f32 %v1523, %v1667
        %1684 = vadd.xlane.f32.xlu0 %v1621
        %v1685 = vpop.xlane.xlu0 %1684
        %1686 = vadd.xlane.f32.xlu0 %v1623
        %v1687 = vpop.xlane.xlu0 %1686
        %1688 = vadd.xlane.f32.xlu0 %v1625
        %v1689 = vpop.xlane.xlu0 %1688
        %1690 = vadd.xlane.f32.xlu0 %v1627
        %v1691 = vpop.xlane.xlu0 %1690
        %1692 = vadd.xlane.f32.xlu0 %v1629
        %v1693 = vpop.xlane.xlu0 %1692
        %1694 = vadd.xlane.f32.xlu0 %v1631
        %v1695 = vpop.xlane.xlu0 %1694
        %1696 = vadd.xlane.f32.xlu0 %v1633
        %v1697 = vpop.xlane.xlu0 %1696
        %1698 = vadd.xlane.f32.xlu0 %v1635
        %v1699 = vpop.xlane.xlu0 %1698
        %1700 = vadd.xlane.f32.xlu0 %v1637
        %v1701 = vpop.xlane.xlu0 %1700
        %1702 = vadd.xlane.f32.xlu0 %v1639
        %v1703 = vpop.xlane.xlu0 %1702
        %1704 = vadd.xlane.f32.xlu0 %v1641
        %v1705 = vpop.xlane.xlu0 %1704
        %1706 = vadd.xlane.f32.xlu0 %v1643
        %v1707 = vpop.xlane.xlu0 %1706
        %1708 = vadd.xlane.f32.xlu0 %v1645
        %v1709 = vpop.xlane.xlu0 %1708
        %1710 = vadd.xlane.f32.xlu0 %v1647
        %v1711 = vpop.xlane.xlu0 %1710
        %1712 = vadd.xlane.f32.xlu0 %v1649
        %v1713 = vpop.xlane.xlu0 %1712
        %1714 = vadd.xlane.f32.xlu0 %v1651
        %v1715 = vpop.xlane.xlu0 %1714
        %v1716 = vadd.f32 %v1668, %v1685
        %v1717 = vadd.f32 %v1669, %v1687
        %v1718 = vadd.f32 %v1670, %v1689
        %v1719 = vadd.f32 %v1671, %v1691
        %v1720 = vadd.f32 %v1672, %v1693
        %v1721 = vadd.f32 %v1673, %v1695
        %v1722 = vadd.f32 %v1674, %v1697
        %v1723 = vadd.f32 %v1675, %v1699
        %v1724 = vadd.f32 %v1676, %v1701
        %v1725 = vadd.f32 %v1677, %v1703
        %v1726 = vadd.f32 %v1678, %v1705
        %v1727 = vadd.f32 %v1679, %v1707
        %v1728 = vadd.f32 %v1680, %v1709
        %v1729 = vadd.f32 %v1681, %v1711
        %v1730 = vadd.f32 %v1682, %v1713
        %v1731 = vadd.f32 %v1683, %v1715
        %vm1732 = vcmask 7168
        %1733 = vst.msk [vmem:[#allocation4] sm:$0xff] %vm1732, %v1716
        %1734 = vst.msk [vmem:[#allocation4 + $0x8] sm:$0xff] %vm1732, %v1717
        %1735 = vst.msk [vmem:[#allocation4 + $0x10] sm:$0xff] %vm1732, %v1718
        %1736 = vst.msk [vmem:[#allocation4 + $0x18] sm:$0xff] %vm1732, %v1719
        %1737 = vst.msk [vmem:[#allocation4 + $0x20] sm:$0xff] %vm1732, %v1720
        %1738 = vst.msk [vmem:[#allocation4 + $0x28] sm:$0xff] %vm1732, %v1721
        %1739 = vst.msk [vmem:[#allocation4 + $0x30] sm:$0xff] %vm1732, %v1722
        %1740 = vst.msk [vmem:[#allocation4 + $0x38] sm:$0xff] %vm1732, %v1723
        %1741 = vst.msk [vmem:[#allocation4 + $0x40] sm:$0xff] %vm1732, %v1724
        %1742 = vst.msk [vmem:[#allocation4 + $0x48] sm:$0xff] %vm1732, %v1725
        %1743 = vst.msk [vmem:[#allocation4 + $0x50] sm:$0xff] %vm1732, %v1726
        %1744 = vst.msk [vmem:[#allocation4 + $0x58] sm:$0xff] %vm1732, %v1727
        %1745 = vst.msk [vmem:[#allocation4 + $0x60] sm:$0xff] %vm1732, %v1728
        %1746 = vst.msk [vmem:[#allocation4 + $0x68] sm:$0xff] %vm1732, %v1729
        %1747 = vst.msk [vmem:[#allocation4 + $0x70] sm:$0xff] %vm1732, %v1730
        %1748 = vst.msk [vmem:[#allocation4 + $0x78] sm:$0xff] %vm1732, %v1731
        %v1749 = vld [vmem:[#allocation5] sm:$0xff]
        %v1750 = vld [vmem:[#allocation5 + $0x8] sm:$0xff]
        %v1751 = vld [vmem:[#allocation5 + $0x10] sm:$0xff]
        %v1752 = vld [vmem:[#allocation5 + $0x18] sm:$0xff]
        %v1753 = vld [vmem:[#allocation5 + $0x20] sm:$0xff]
        %v1754 = vld [vmem:[#allocation5 + $0x28] sm:$0xff]
        %v1755 = vld [vmem:[#allocation5 + $0x30] sm:$0xff]
        %v1756 = vld [vmem:[#allocation5 + $0x38] sm:$0xff]
        %v1757 = vld [vmem:[#allocation5 + $0x40] sm:$0xff]
        %v1758 = vld [vmem:[#allocation5 + $0x48] sm:$0xff]
        %v1759 = vld [vmem:[#allocation5 + $0x50] sm:$0xff]
        %v1760 = vld [vmem:[#allocation5 + $0x58] sm:$0xff]
        %v1761 = vld [vmem:[#allocation5 + $0x60] sm:$0xff]
        %v1762 = vld [vmem:[#allocation5 + $0x68] sm:$0xff]
        %v1763 = vld [vmem:[#allocation5 + $0x70] sm:$0xff]
        %v1764 = vld [vmem:[#allocation5 + $0x78] sm:$0xff]
        %1766 = vset.pattern.permute.xlu0 0
        %1767 = vperm.xlu0 %1766, %v1493
        %v1768 = vpop.permute.xlu0 %1767
        %1771 = vset.pattern.permute.xlu0 0
        %1772 = vperm.xlu0 %1771, %v1495
        %v1773 = vpop.permute.xlu0 %1772
        %1776 = vset.pattern.permute.xlu0 0
        %1777 = vperm.xlu0 %1776, %v1497
        %v1778 = vpop.permute.xlu0 %1777
        %1781 = vset.pattern.permute.xlu0 0
        %1782 = vperm.xlu0 %1781, %v1499
        %v1783 = vpop.permute.xlu0 %1782
        %1786 = vset.pattern.permute.xlu0 0
        %1787 = vperm.xlu0 %1786, %v1501
        %v1788 = vpop.permute.xlu0 %1787
        %1791 = vset.pattern.permute.xlu0 0
        %1792 = vperm.xlu0 %1791, %v1503
        %v1793 = vpop.permute.xlu0 %1792
        %1796 = vset.pattern.permute.xlu0 0
        %1797 = vperm.xlu0 %1796, %v1505
        %v1798 = vpop.permute.xlu0 %1797
        %1801 = vset.pattern.permute.xlu0 0
        %1802 = vperm.xlu0 %1801, %v1507
        %v1803 = vpop.permute.xlu0 %1802
        %1806 = vset.pattern.permute.xlu0 0
        %1807 = vperm.xlu0 %1806, %v1509
        %v1808 = vpop.permute.xlu0 %1807
        %1811 = vset.pattern.permute.xlu0 0
        %1812 = vperm.xlu0 %1811, %v1511
        %v1813 = vpop.permute.xlu0 %1812
        %1816 = vset.pattern.permute.xlu0 0
        %1817 = vperm.xlu0 %1816, %v1513
        %v1818 = vpop.permute.xlu0 %1817
        %1821 = vset.pattern.permute.xlu0 0
        %1822 = vperm.xlu0 %1821, %v1515
        %v1823 = vpop.permute.xlu0 %1822
        %1826 = vset.pattern.permute.xlu0 0
        %1827 = vperm.xlu0 %1826, %v1517
        %v1828 = vpop.permute.xlu0 %1827
        %1831 = vset.pattern.permute.xlu0 0
        %1832 = vperm.xlu0 %1831, %v1519
        %v1833 = vpop.permute.xlu0 %1832
        %1836 = vset.pattern.permute.xlu0 0
        %1837 = vperm.xlu0 %1836, %v1521
        %v1838 = vpop.permute.xlu0 %1837
        %1841 = vset.pattern.permute.xlu0 0
        %1842 = vperm.xlu0 %1841, %v1523
        %v1843 = vpop.permute.xlu0 %1842
        %v1845 = vmul.f32 %v1768, %v1749
        %v1846 = vmul.f32 %v1773, %v1750
        %v1847 = vmul.f32 %v1778, %v1751
        %v1848 = vmul.f32 %v1783, %v1752
        %v1849 = vmul.f32 %v1788, %v1753
        %v1850 = vmul.f32 %v1793, %v1754
        %v1851 = vmul.f32 %v1798, %v1755
        %v1852 = vmul.f32 %v1803, %v1756
        %v1853 = vmul.f32 %v1808, %v1757
        %v1854 = vmul.f32 %v1813, %v1758
        %v1855 = vmul.f32 %v1818, %v1759
        %v1856 = vmul.f32 %v1823, %v1760
        %v1857 = vmul.f32 %v1828, %v1761
        %v1858 = vmul.f32 %v1833, %v1762
        %v1859 = vmul.f32 %v1838, %v1763
        %v1860 = vmul.f32 %v1843, %v1764
        %v1861 = vpack.c.bf16 %v1623, %v1621
        %v1862 = vpack.c.bf16 %v1627, %v1625
        %v1863 = vpack.c.bf16 %v1631, %v1629
        %v1864 = vpack.c.bf16 %v1635, %v1633
        %v1865 = vpack.c.bf16 %v1639, %v1637
        %v1866 = vpack.c.bf16 %v1643, %v1641
        %v1867 = vpack.c.bf16 %v1647, %v1645
        %v1868 = vpack.c.bf16 %v1651, %v1649
        %1869 = vmatprep.subr.bf16.mxu0 0
        %1870 = vmatpush1.bf16.msra.mxu0 %v1299
        %1871 = vmatprep.subr.bf16.mxu0 0
        %1872 = vmatpush1.bf16.msra.mxu0 %v1300
        %1873 = vmatprep.subr.bf16.mxu0 0
        %1874 = vmatpush1.bf16.msra.mxu0 %v1301
        %1875 = vmatprep.subr.bf16.mxu0 0
        %1876 = vmatpush1.bf16.msra.mxu0 %v1302
        %1877 = vmatprep.subr.bf16.mxu0 0
        %1878 = vmatpush1.bf16.msra.mxu0 %v1303
        %1879 = vmatprep.subr.bf16.mxu0 0
        %1880 = vmatpush1.bf16.msra.mxu0 %v1304
        %1881 = vmatprep.subr.bf16.mxu0 0
        %1882 = vmatpush1.bf16.msra.mxu0 %v1305
        %1883 = vmatprep.subr.bf16.mxu0 0
        %1884 = vmatpush1.bf16.msra.mxu0 %v1306
        %1885 = vmatprep.subr.bf16.mxu0 0
        %1886 = vmatpush1.bf16.msra.mxu0 0
        %1887 = vmatprep.subr.bf16.mxu0 0
        %1888 = vmatpush1.bf16.msra.mxu0 0
        %1889 = vmatprep.subr.bf16.mxu0 0
        %1890 = vmatpush1.bf16.msra.mxu0 0
        %1891 = vmatprep.subr.bf16.mxu0 0
        %1892 = vmatpush1.bf16.msra.mxu0 0
        %1893 = vmatprep.subr.bf16.mxu0 0
        %1894 = vmatpush1.bf16.msra.mxu0 0
        %1895 = vmatprep.subr.bf16.mxu0 0
        %1896 = vmatpush1.bf16.msra.mxu0 0
        %1897 = vmatprep.subr.bf16.mxu0 0
        %1898 = vmatpush1.bf16.msra.mxu0 0
        %1899 = vmatprep.subr.bf16.mxu0 0
        %1900 = vmatpush1.bf16.msra.mxu0 0
        %1901 = vmatprep.mubr.bf16.mxu0 0
        %1902 = vmatmul.mubr.bf16.gmra.mrb[0].mxu0 %v1861
        %v1903 = vpop.f32.mrb[0].mxu0
        %v1904 = vadd.f32 0.0, %v1903
        %v1905 = vpop.f32.mrb[0].mxu0
        %v1906 = vpop.f32.mrb[0].mxu0
        %v1907 = vadd.f32 0.0, %v1906
        %v1908 = vpop.f32.mrb[0].mxu0
        %1909 = vmatprep.mubr.bf16.mxu0 0
        %1910 = vmatmul.mubr.bf16.gmra.mrb[0].mxu0 %v1862
        %v1911 = vpop.f32.mrb[0].mxu0
        %v1912 = vadd.f32 0.0, %v1911
        %v1913 = vpop.f32.mrb[0].mxu0
        %v1914 = vpop.f32.mrb[0].mxu0
        %v1915 = vadd.f32 0.0, %v1914
        %v1916 = vpop.f32.mrb[0].mxu0
        %1917 = vmatprep.mubr.bf16.mxu0 0
        %1918 = vmatmul.mubr.bf16.gmra.mrb[0].mxu0 %v1863
        %v1919 = vpop.f32.mrb[0].mxu0
        %v1920 = vadd.f32 0.0, %v1919
        %v1921 = vpop.f32.mrb[0].mxu0
        %v1922 = vpop.f32.mrb[0].mxu0
        %v1923 = vadd.f32 0.0, %v1922
        %v1924 = vpop.f32.mrb[0].mxu0
        %1925 = vmatprep.mubr.bf16.mxu0 0
        %1926 = vmatmul.mubr.bf16.gmra.mrb[0].mxu0 %v1864
        %v1927 = vpop.f32.mrb[0].mxu0
        %v1928 = vadd.f32 0.0, %v1927
        %v1929 = vpop.f32.mrb[0].mxu0
        %v1930 = vpop.f32.mrb[0].mxu0
        %v1931 = vadd.f32 0.0, %v1930
        %v1932 = vpop.f32.mrb[0].mxu0
        %1933 = vmatprep.mubr.bf16.mxu0 0
        %1934 = vmatmul.mubr.bf16.gmra.mrb[0].mxu0 %v1865
        %v1935 = vpop.f32.mrb[0].mxu0
        %v1936 = vadd.f32 0.0, %v1935
        %v1937 = vpop.f32.mrb[0].mxu0
        %v1938 = vpop.f32.mrb[0].mxu0
        %v1939 = vadd.f32 0.0, %v1938
        %v1940 = vpop.f32.mrb[0].mxu0
        %1941 = vmatprep.mubr.bf16.mxu0 0
        %1942 = vmatmul.mubr.bf16.gmra.mrb[0].mxu0 %v1866
        %v1943 = vpop.f32.mrb[0].mxu0
        %v1944 = vadd.f32 0.0, %v1943
        %v1945 = vpop.f32.mrb[0].mxu0
        %v1946 = vpop.f32.mrb[0].mxu0
        %v1947 = vadd.f32 0.0, %v1946
        %v1948 = vpop.f32.mrb[0].mxu0
        %1949 = vmatprep.mubr.bf16.mxu0 0
        %1950 = vmatmul.mubr.bf16.gmra.mrb[0].mxu0 %v1867
        %v1951 = vpop.f32.mrb[0].mxu0
        %v1952 = vadd.f32 0.0, %v1951
        %v1953 = vpop.f32.mrb[0].mxu0
        %v1954 = vpop.f32.mrb[0].mxu0
        %v1955 = vadd.f32 0.0, %v1954
        %v1956 = vpop.f32.mrb[0].mxu0
        %1957 = vmatprep.mubr.bf16.mxu0 0
        %1958 = vmatmul.mubr.bf16.gmra.mrb[0].mxu0 %v1868
        %v1959 = vpop.f32.mrb[0].mxu0
        %v1960 = vadd.f32 0.0, %v1959
        %v1961 = vpop.f32.mrb[0].mxu0
        %v1962 = vpop.f32.mrb[0].mxu0
        %v1963 = vadd.f32 0.0, %v1962
        %v1964 = vpop.f32.mrb[0].mxu0
        %1965 = vdwg.mxu0
        %v1966 = vadd.f32 %v1845, %v1904
        %v1967 = vadd.f32 %v1846, %v1907
        %v1968 = vadd.f32 %v1847, %v1912
        %v1969 = vadd.f32 %v1848, %v1915
        %v1970 = vadd.f32 %v1849, %v1920
        %v1971 = vadd.f32 %v1850, %v1923
        %v1972 = vadd.f32 %v1851, %v1928
        %v1973 = vadd.f32 %v1852, %v1931
        %v1974 = vadd.f32 %v1853, %v1936
        %v1975 = vadd.f32 %v1854, %v1939
        %v1976 = vadd.f32 %v1855, %v1944
        %v1977 = vadd.f32 %v1856, %v1947
        %v1978 = vadd.f32 %v1857, %v1952
        %v1979 = vadd.f32 %v1858, %v1955
        %v1980 = vadd.f32 %v1859, %v1960
        %v1981 = vadd.f32 %v1860, %v1963
        %1982 = vst [vmem:[#allocation5] sm:$0xff] %v1966
        %1983 = vst [vmem:[#allocation5 + $0x8] sm:$0xff] %v1967
        %1984 = vst [vmem:[#allocation5 + $0x10] sm:$0xff] %v1968
        %1985 = vst [vmem:[#allocation5 + $0x18] sm:$0xff] %v1969
        %1986 = vst [vmem:[#allocation5 + $0x20] sm:$0xff] %v1970
        %1987 = vst [vmem:[#allocation5 + $0x28] sm:$0xff] %v1971
        %1988 = vst [vmem:[#allocation5 + $0x30] sm:$0xff] %v1972
        %1989 = vst [vmem:[#allocation5 + $0x38] sm:$0xff] %v1973
        %1990 = vst [vmem:[#allocation5 + $0x40] sm:$0xff] %v1974
        %1991 = vst [vmem:[#allocation5 + $0x48] sm:$0xff] %v1975
        %1992 = vst [vmem:[#allocation5 + $0x50] sm:$0xff] %v1976
        %1993 = vst [vmem:[#allocation5 + $0x58] sm:$0xff] %v1977
        %1994 = vst [vmem:[#allocation5 + $0x60] sm:$0xff] %v1978
        %1995 = vst [vmem:[#allocation5 + $0x68] sm:$0xff] %v1979
        %1996 = vst [vmem:[#allocation5 + $0x70] sm:$0xff] %v1980
        %1997 = vst [vmem:[#allocation5 + $0x78] sm:$0xff] %v1981
        %1998 = vst.msk [vmem:[#allocation3] sm:$0xff] %vm1732, %v1460
        %1999 = vst.msk [vmem:[#allocation3 + $0x8] sm:$0xff] %vm1732, %v1461
        %2000 = vst.msk [vmem:[#allocation3 + $0x10] sm:$0xff] %vm1732, %v1462
        %2001 = vst.msk [vmem:[#allocation3 + $0x18] sm:$0xff] %vm1732, %v1463
        %2002 = vst.msk [vmem:[#allocation3 + $0x20] sm:$0xff] %vm1732, %v1464
        %2003 = vst.msk [vmem:[#allocation3 + $0x28] sm:$0xff] %vm1732, %v1465
        %2004 = vst.msk [vmem:[#allocation3 + $0x30] sm:$0xff] %vm1732, %v1466
        %2005 = vst.msk [vmem:[#allocation3 + $0x38] sm:$0xff] %vm1732, %v1467
        %2006 = vst.msk [vmem:[#allocation3 + $0x40] sm:$0xff] %vm1732, %v1468
        %2007 = vst.msk [vmem:[#allocation3 + $0x48] sm:$0xff] %vm1732, %v1469
        %2008 = vst.msk [vmem:[#allocation3 + $0x50] sm:$0xff] %vm1732, %v1470
        %2009 = vst.msk [vmem:[#allocation3 + $0x58] sm:$0xff] %vm1732, %v1471
        %2010 = vst.msk [vmem:[#allocation3 + $0x60] sm:$0xff] %vm1732, %v1472
        %2011 = vst.msk [vmem:[#allocation3 + $0x68] sm:$0xff] %vm1732, %v1473
        %2012 = vst.msk [vmem:[#allocation3 + $0x70] sm:$0xff] %vm1732, %v1474
        %2013 = vst.msk [vmem:[#allocation3 + $0x78] sm:$0xff] %vm1732, %v1475
        %p2014 = scmp.eq.s32.totalorder %s38, 1
        // Predicated region
        $region85: #{tpu_custom_call.1} parent=55 // pred_check
          %p2015 = pneg %p2014
        $region86: #{tpu_custom_call.1} parent=55 // pred_check_branch
          %2017 = sbr.rel (%p2015) target = $region88
        $region87: #{tpu_custom_call.1} parent=55 // pred_region
          %v2018 = vld [vmem:[#allocation4] sm:$0xff]
          %v2019 = vld [vmem:[#allocation4 + $0x8] sm:$0xff]
          %v2020 = vld [vmem:[#allocation4 + $0x10] sm:$0xff]
          %v2021 = vld [vmem:[#allocation4 + $0x18] sm:$0xff]
          %v2022 = vld [vmem:[#allocation4 + $0x20] sm:$0xff]
          %v2023 = vld [vmem:[#allocation4 + $0x28] sm:$0xff]
          %v2024 = vld [vmem:[#allocation4 + $0x30] sm:$0xff]
          %v2025 = vld [vmem:[#allocation4 + $0x38] sm:$0xff]
          %v2026 = vld [vmem:[#allocation4 + $0x40] sm:$0xff]
          %v2027 = vld [vmem:[#allocation4 + $0x48] sm:$0xff]
          %v2028 = vld [vmem:[#allocation4 + $0x50] sm:$0xff]
          %v2029 = vld [vmem:[#allocation4 + $0x58] sm:$0xff]
          %v2030 = vld [vmem:[#allocation4 + $0x60] sm:$0xff]
          %v2031 = vld [vmem:[#allocation4 + $0x68] sm:$0xff]
          %v2032 = vld [vmem:[#allocation4 + $0x70] sm:$0xff]
          %v2033 = vld [vmem:[#allocation4 + $0x78] sm:$0xff]
          %v2034 = vrcp.pop %v2018
          %v2035 = vrcp.pop %v2019
          %v2036 = vrcp.pop %v2020
          %v2037 = vrcp.pop %v2021
          %v2038 = vrcp.pop %v2022
          %v2039 = vrcp.pop %v2023
          %v2040 = vrcp.pop %v2024
          %v2041 = vrcp.pop %v2025
          %v2042 = vrcp.pop %v2026
          %v2043 = vrcp.pop %v2027
          %v2044 = vrcp.pop %v2028
          %v2045 = vrcp.pop %v2029
          %v2046 = vrcp.pop %v2030
          %v2047 = vrcp.pop %v2031
          %v2048 = vrcp.pop %v2032
          %v2049 = vrcp.pop %v2033
          %v2050 = vld [vmem:[#allocation5] sm:$0xff]
          %v2051 = vld [vmem:[#allocation5 + $0x8] sm:$0xff]
          %v2052 = vld [vmem:[#allocation5 + $0x10] sm:$0xff]
          %v2053 = vld [vmem:[#allocation5 + $0x18] sm:$0xff]
          %v2054 = vld [vmem:[#allocation5 + $0x20] sm:$0xff]
          %v2055 = vld [vmem:[#allocation5 + $0x28] sm:$0xff]
          %v2056 = vld [vmem:[#allocation5 + $0x30] sm:$0xff]
          %v2057 = vld [vmem:[#allocation5 + $0x38] sm:$0xff]
          %v2058 = vld [vmem:[#allocation5 + $0x40] sm:$0xff]
          %v2059 = vld [vmem:[#allocation5 + $0x48] sm:$0xff]
          %v2060 = vld [vmem:[#allocation5 + $0x50] sm:$0xff]
          %v2061 = vld [vmem:[#allocation5 + $0x58] sm:$0xff]
          %v2062 = vld [vmem:[#allocation5 + $0x60] sm:$0xff]
          %v2063 = vld [vmem:[#allocation5 + $0x68] sm:$0xff]
          %v2064 = vld [vmem:[#allocation5 + $0x70] sm:$0xff]
          %v2065 = vld [vmem:[#allocation5 + $0x78] sm:$0xff]
          %2067 = vset.pattern.permute.xlu0 0
          %2068 = vperm.xlu0 %2067, %v2034
          %v2069 = vpop.permute.xlu0 %2068
          %2072 = vset.pattern.permute.xlu0 0
          %2073 = vperm.xlu0 %2072, %v2035
          %v2074 = vpop.permute.xlu0 %2073
          %2077 = vset.pattern.permute.xlu0 0
          %2078 = vperm.xlu0 %2077, %v2036
          %v2079 = vpop.permute.xlu0 %2078
          %2082 = vset.pattern.permute.xlu0 0
          %2083 = vperm.xlu0 %2082, %v2037
          %v2084 = vpop.permute.xlu0 %2083
          %2087 = vset.pattern.permute.xlu0 0
          %2088 = vperm.xlu0 %2087, %v2038
          %v2089 = vpop.permute.xlu0 %2088
          %2092 = vset.pattern.permute.xlu0 0
          %2093 = vperm.xlu0 %2092, %v2039
          %v2094 = vpop.permute.xlu0 %2093
          %2097 = vset.pattern.permute.xlu0 0
          %2098 = vperm.xlu0 %2097, %v2040
          %v2099 = vpop.permute.xlu0 %2098
          %2102 = vset.pattern.permute.xlu0 0
          %2103 = vperm.xlu0 %2102, %v2041
          %v2104 = vpop.permute.xlu0 %2103
          %2107 = vset.pattern.permute.xlu0 0
          %2108 = vperm.xlu0 %2107, %v2042
          %v2109 = vpop.permute.xlu0 %2108
          %2112 = vset.pattern.permute.xlu0 0
          %2113 = vperm.xlu0 %2112, %v2043
          %v2114 = vpop.permute.xlu0 %2113
          %2117 = vset.pattern.permute.xlu0 0
          %2118 = vperm.xlu0 %2117, %v2044
          %v2119 = vpop.permute.xlu0 %2118
          %2122 = vset.pattern.permute.xlu0 0
          %2123 = vperm.xlu0 %2122, %v2045
          %v2124 = vpop.permute.xlu0 %2123
          %2127 = vset.pattern.permute.xlu0 0
          %2128 = vperm.xlu0 %2127, %v2046
          %v2129 = vpop.permute.xlu0 %2128
          %2132 = vset.pattern.permute.xlu0 0
          %2133 = vperm.xlu0 %2132, %v2047
          %v2134 = vpop.permute.xlu0 %2133
          %2137 = vset.pattern.permute.xlu0 0
          %2138 = vperm.xlu0 %2137, %v2048
          %v2139 = vpop.permute.xlu0 %2138
          %2142 = vset.pattern.permute.xlu0 0
          %2143 = vperm.xlu0 %2142, %v2049
          %v2144 = vpop.permute.xlu0 %2143
          %v2146 = vmul.f32 %v2050, %v2069
          %v2147 = vmul.f32 %v2051, %v2074
          %v2148 = vmul.f32 %v2052, %v2079
          %v2149 = vmul.f32 %v2053, %v2084
          %v2150 = vmul.f32 %v2054, %v2089
          %v2151 = vmul.f32 %v2055, %v2094
          %v2152 = vmul.f32 %v2056, %v2099
          %v2153 = vmul.f32 %v2057, %v2104
          %v2154 = vmul.f32 %v2058, %v2109
          %v2155 = vmul.f32 %v2059, %v2114
          %v2156 = vmul.f32 %v2060, %v2119
          %v2157 = vmul.f32 %v2061, %v2124
          %v2158 = vmul.f32 %v2062, %v2129
          %v2159 = vmul.f32 %v2063, %v2134
          %v2160 = vmul.f32 %v2064, %v2139
          %v2161 = vmul.f32 %v2065, %v2144
          %2162 = vst [vmem:[%s504] sm:$0xff] %v2146
          %2163 = vst [vmem:[%s504 + $0x8] sm:$0xff] %v2147
          %2164 = vst [vmem:[%s504 + $0x10] sm:$0xff] %v2148
          %2165 = vst [vmem:[%s504 + $0x18] sm:$0xff] %v2149
          %2166 = vst [vmem:[%s504 + $0x20] sm:$0xff] %v2150
          %2167 = vst [vmem:[%s504 + $0x28] sm:$0xff] %v2151
          %2168 = vst [vmem:[%s504 + $0x30] sm:$0xff] %v2152
          %2169 = vst [vmem:[%s504 + $0x38] sm:$0xff] %v2153
          %2170 = vst [vmem:[%s504 + $0x40] sm:$0xff] %v2154
          %2171 = vst [vmem:[%s504 + $0x48] sm:$0xff] %v2155
          %2172 = vst [vmem:[%s504 + $0x50] sm:$0xff] %v2156
          %2173 = vst [vmem:[%s504 + $0x58] sm:$0xff] %v2157
          %2174 = vst [vmem:[%s504 + $0x60] sm:$0xff] %v2158
          %2175 = vst [vmem:[%s504 + $0x68] sm:$0xff] %v2159
          %2176 = vst [vmem:[%s504 + $0x70] sm:$0xff] %v2160
          %2177 = vst [vmem:[%s504 + $0x78] sm:$0xff] %v2161
        $region88: #{tpu_custom_call.1} parent=55 // pred_fallthru
          _
        %s2178 = sand.u32 %s270, 1
        %s2179 = scalar_lea.sflag [#allocation8], %s2178
        %s2180 = sand.u32 %s270, 1
        %s2181 = smul.addr %s2180, 128
        %s2182 = scalar_lea.vmem [#allocation17], %s2181
        // Predicated region
        $region89: #{tpu_custom_call.1} parent=55 // pred_check
          %p2183 = pneg %p280
        $region90: #{tpu_custom_call.1} parent=55 // pred_check_branch
          %2185 = sbr.rel (%p2183) target = $region92
        $region91: #{tpu_custom_call.1} parent=55 // pred_region
          %s2186 = smul.u32 16, %s37
          %s2188 = ssub.s32 2048, 2048
          %2189 = vsyncadd %s2179, %s2188
          %s2190 = smul.addr %s36, 32
          %s2191 = sadd.s32 %s2186, %s2190
          %s2192 = smul.addr %s2191, 128
          %s2193 = scalar_lea.hbm %s9, %s2192
          %s2194 = sshll.u32 %s2182, 4
          %s2195 = int_to_ptr.vmem [resolvable:$true] %s2194
          %2200 = dma.vmem_to_hbm [thread:$0]  %s2195, 2048, %s2193, %s2179, 128, 128, 8
        $region92: #{tpu_custom_call.1} parent=55 // pred_fallthru
          _
      $region56: #{tpu_custom_call.1} parent=5 // pred_fallthru
        _
      %p2201 = scmp.le.s32.totalorder 2, %s26
      // Predicated region
      $region93: #{tpu_custom_call.1} parent=5 // pred_check
        %p2202 = pneg %p2201
      $region94: #{tpu_custom_call.1} parent=5 // pred_check_branch
        %2204 = sbr.rel (%p2202) target = $region96
      $region95: #{tpu_custom_call.1} parent=5 // pred_region
        %s2205 = ssub.s32 %s26, 2
        // Predicated region
        $region97: #{tpu_custom_call.1} parent=95 // pred_check
          %p2206 = pneg %p286
        $region98: #{tpu_custom_call.1} parent=95 // pred_check_branch
          %2208 = sbr.rel (%p2206) target = $region100
        $region99: #{tpu_custom_call.1} parent=95 // pred_region
          %s2209 = sand.u32 %s271, 1
          %s2210 = scalar_lea.sflag [#allocation8], %s2209
          %s2211 = sand.u32 %s271, 1
          %s2212 = smul.addr %s2211, 128
          %s2213 = scalar_lea.vmem [#allocation17], %s2212
          %2214 = dma.done %s2210, 2048
        $region100: #{tpu_custom_call.1} parent=95 // pred_fallthru
          _
      $region96: #{tpu_custom_call.1} parent=5 // pred_fallthru
        _
    $region6: #{tpu_custom_call.1} parent=1 // loop_footer
      %s30 = sadd.s32 1, %s26
    $region7: #{tpu_custom_call.1} parent=1 // loop_footer_branch
      %25 = sbr.rel target = $region3
    $region8: #{tpu_custom_call.1} parent=1 // loop_exit
      _
    %2215 = vsyncpa [#allocation7], 1
    %s2216 = scalar_lea.sflag [#allocation7], 1
    %2217 = vsyncpa %s2216, 1
    %2218 = vsyncpa [#allocation10], 1
    %s2219 = scalar_lea.sflag [#allocation10], 1
    %2220 = vsyncpa %s2219, 1
    %2221 = vsyncpa [#allocation13], 1
    %2222 = vsyncpa [#allocation16], 1
    %2223 = vsyncpa [#allocation8], 1
    %s2224 = scalar_lea.sflag [#allocation8], 1
    %2225 = vsyncpa %s2224, 1

</llo_original>
